<compile_context>
chip_gen: v5e
topology: v5e:2x2
jax: 0.10.0
libtpu: 0.0.40
codegen_flags: <defaults>
</compile_context>

<pallas_src>
import math

import jax
import jax.numpy as jnp
from jax.experimental import pallas as pl
from jax.experimental.pallas import tpu as pltpu


def _make_cross_attn_kernel(n_heads: int, d_head: int, s_q: int, s_kv: int, d_token: int):
    scale = 1.0 / math.sqrt(d_head)
    s_tot = s_q + s_kv
    neg_inf = -1e30  # finite "masked" value -> no inf-inf NaN risk

    def kernel(xq_ref, xkv_ref,
               wqkv_ref, bqkv_ref, wo_ref, bo_ref,
               out_tab_ref, out_ts_ref):
        # Concatenate both token sets: each input is read from HBM exactly once and
        # every downstream matmul operates on the larger (S_q + S_kv) row dimension.
        x_all = jnp.concatenate(
            [xq_ref[0].astype(jnp.float32), xkv_ref[0].astype(jnp.float32)],
            axis=0)                                                   # (S_tot, E)

        wqkv = wqkv_ref[...].astype(jnp.float32)                      # (E, 3E)
        bqkv = bqkv_ref[...].astype(jnp.float32)                      # (1, 3E)
        wo = wo_ref[...].astype(jnp.float32)                          # (E, E)
        bo = bo_ref[...].astype(jnp.float32)                          # (1, E)

        # Single fused QKV projection for both directions.
        qkv = jnp.dot(x_all, wqkv, preferred_element_type=jnp.float32) + bqkv
        q_all = qkv[:, :d_token]                                      # (S_tot, E)
        k_all = qkv[:, d_token:2 * d_token]
        v_all = qkv[:, 2 * d_token:]

        # Cross-block mask: row i (from x_q iff i < S_q) may only attend to columns
        # of the *other* token set.  Masked softmax over the joint logits is exactly
        # the two independent softmaxes of the reference module.
        row = jax.lax.broadcasted_iota(jnp.int32, (s_tot, s_tot), 0)
        col = jax.lax.broadcasted_iota(jnp.int32, (s_tot, s_tot), 1)
        allow = jnp.logical_xor(row < s_q, col < s_q)

        # Static per-head loop (n_heads is small & static); each head is two MXU
        # matmuls + a stable masked softmax.
        head_ctx = []
        for h in range(n_heads):
            lo = h * d_head
            qh = q_all[:, lo:lo + d_head]                             # (S_tot, d_head)
            kh = k_all[:, lo:lo + d_head]
            vh = v_all[:, lo:lo + d_head]
            logits = jax.lax.dot_general(
                qh, kh, (((1,), (1,)), ((), ())),
                preferred_element_type=jnp.float32) * scale           # (S_tot, S_tot)
            logits = jnp.where(allow, logits, neg_inf)
            m = jnp.max(logits, axis=-1, keepdims=True)
            p = jnp.exp(logits - m)
            probs = p / jnp.sum(p, axis=-1, keepdims=True)
            # TODO(synk): training-mode dropout on `probs` not implemented
            # (nn.Dropout is identity at inference / dropout=0).
            head_ctx.append(
                jnp.dot(probs, vh, preferred_element_type=jnp.float32))
        ctx = jnp.concatenate(head_ctx, axis=-1)                      # (S_tot, E)

        # One mixing matmul for both directions.
        out_all = jnp.dot(ctx, wo, preferred_element_type=jnp.float32) + bo

        out_tab_ref[0] = out_all[:s_q].astype(out_tab_ref.dtype)      # (S_q, E)
        out_ts_ref[0] = out_all[s_q:].astype(out_ts_ref.dtype)        # (S_kv, E)

    return kernel


def build_kernel_params(wq, bq, wk, bk, wv, bv, wo, bo):
    """One-time layout plumbing.

    PyTorch Linear weights are (out, in); the kernel wants y = x @ W, so transpose.
    Q/K/V are packed into one (E, 3E) weight + (1, 3E) bias so the kernel does a
    single fused projection matmul. n_heads == 1 => no mixing layer => identity W_out.
    """
    e = wq.shape[0]
    if wo is None:                      # n_heads == 1: module has no mixing layer
        wo = jnp.eye(e, dtype=wq.dtype)
        bo = jnp.zeros((e,), dtype=wq.dtype)
    wqkv_t = jnp.concatenate([wq.T, wk.T, wv.T], axis=1)              # (E, 3E)
    bqkv = jnp.concatenate([bq, bk, bv]).reshape(1, 3 * e)            # (1, 3E)
    return dict(
        wqkv_t=wqkv_t, bqkv=bqkv,
        wo_t=wo.T, bo=bo.reshape(1, e),
    )


def multihead_cross_attention(x_q, x_kv, params, n_heads):
    n, s_q, e = x_q.shape
    n2, s_kv, e2 = x_kv.shape
    assert n == n2 and e == e2 and e % n_heads == 0
    d_head = e // n_heads

    kernel = _make_cross_attn_kernel(n_heads, d_head, s_q, s_kv, e)
    resident2d = lambda i: (0, 0)

    return pl.pallas_call(
        kernel,
        out_shape=(jax.ShapeDtypeStruct((n, s_q, e), x_q.dtype),
                   jax.ShapeDtypeStruct((n, s_kv, e), x_kv.dtype)),
        grid=(n,),
        in_specs=[
            pl.BlockSpec((1, s_q, e), lambda i: (i, 0, 0)),
            pl.BlockSpec((1, s_kv, e), lambda i: (i, 0, 0)),
            pl.BlockSpec((e, 3 * e), resident2d),   # packed [Wq^T | Wk^T | Wv^T] (resident)
            pl.BlockSpec((1, 3 * e), resident2d),   # packed [bq | bk | bv]
            pl.BlockSpec((e, e), resident2d),       # W_out^T
            pl.BlockSpec((1, e), resident2d),       # b_out
        ],
        out_specs=(pl.BlockSpec((1, s_q, e), lambda i: (i, 0, 0)),
                   pl.BlockSpec((1, s_kv, e), lambda i: (i, 0, 0))),
        compiler_params=pltpu.CompilerParams(
            dimension_semantics=("parallel",)),
    )(x_q, x_kv,
      params["wqkv_t"], params["bqkv"], params["wo_t"], params["bo"])


# ----------------------- pure-JAX reference (PyTorch semantics) -----------------------

def _mha_reference(x_q, x_kv, wq, bq, wk, bk, wv, bv, wo, bo, n_heads):
    def lin(x, w, b):
        return x @ w.T + b

    q, k, v = lin(x_q, wq, bq), lin(x_kv, wk, bk), lin(x_kv, wv, bv)
    n, s_q, e = q.shape
    dh = e // n_heads

    def split(x):
        b, s, d = x.shape
        return (x.reshape(b, s, n_heads, dh)
                 .transpose(0, 2, 1, 3)
                 .reshape(b * n_heads, s, dh))

    qh, kh, vh = split(q), split(k), split(v)
    logits = qh @ kh.transpose(0, 2, 1) / math.sqrt(dh)
    probs = jax.nn.softmax(logits, axis=-1)
    x = probs @ vh
    x = (x.reshape(n, n_heads, s_q, dh)
          .transpose(0, 2, 1, 3)
          .reshape(n, s_q, e))
    if wo is not None:
        x = x @ wo.T + bo
    return x


def cross_attention_reference(x_q, x_kv, wq, bq, wk, bk, wv, bv, wo, bo, n_heads):
    tab = _mha_reference(x_q, x_kv, wq, bq, wk, bk, wv, bv, wo, bo, n_heads)
    ts = _mha_reference(x_kv, x_q, wq, bq, wk, bk, wv, bv, wo, bo, n_heads)
    return tab, ts


if __name__ == "__main__":
    key = jax.random.PRNGKey(0)
    N, S_Q, S_KV, D_TOKEN, N_HEADS = 2, 8, 16, 32, 4

    keys = jax.random.split(key, 6)
    x_q = jax.random.normal(keys[0], (N, S_Q, D_TOKEN), dtype=jnp.float32)
    x_kv = jax.random.normal(keys[1], (N, S_KV, D_TOKEN), dtype=jnp.float32)

    # Deterministic params mirroring the module: uniform(+-1/sqrt(E)) weights,
    # zero-initialized projection / mixing biases (as the module's __init__ does).
    bound = 1.0 / math.sqrt(D_TOKEN)
    wq = jax.random.uniform(keys[2], (D_TOKEN, D_TOKEN), minval=-bound, maxval=bound)
    wk = jax.random.uniform(keys[3], (D_TOKEN, D_TOKEN), minval=-bound, maxval=bound)
    wv = jax.random.uniform(keys[4], (D_TOKEN, D_TOKEN), minval=-bound, maxval=bound)
    wo = jax.random.uniform(keys[5], (D_TOKEN, D_TOKEN), minval=-bound, maxval=bound)
    bq = jnp.zeros((D_TOKEN,), jnp.float32)
    bk = jnp.zeros((D_TOKEN,), jnp.float32)
    bv = jnp.zeros((D_TOKEN,), jnp.float32)
    bo = jnp.zeros((D_TOKEN,), jnp.float32)

    params = build_kernel_params(wq, bq, wk, bk, wv, bv, wo, bo)

    out_tab, out_ts = multihead_cross_attention(x_q, x_kv, params, N_HEADS)
    out_tab, out_ts = jax.block_until_ready((out_tab, out_ts))

    ref_tab, ref_ts = cross_attention_reference(
        x_q, x_kv, wq, bq, wk, bk, wv, bv, wo, bo, N_HEADS)

    assert out_tab.shape == (N, S_Q, D_TOKEN)
    assert out_ts.shape == (N, S_KV, D_TOKEN)
    assert jnp.allclose(out_tab, ref_tab, atol=1e-4, rtol=1e-4), "tabular mismatch"
    assert jnp.allclose(out_ts, ref_ts, atol=1e-4, rtol=1e-4), "ts mismatch"

    print("KERNEL_OK")
</pallas_src>

<mosaic_0001>
module attributes {stable_mosaic.version = 11 : i64} {
  func.func @kernel(%arg0: i32, %arg1: memref<1x8x32xf32, #tpu.memory_space<vmem>>, %arg2: memref<1x16x32xf32, #tpu.memory_space<vmem>>, %arg3: memref<32x96xf32, #tpu.memory_space<vmem>>, %arg4: memref<1x96xf32, #tpu.memory_space<vmem>>, %arg5: memref<32x32xf32, #tpu.memory_space<vmem>>, %arg6: memref<1x32xf32, #tpu.memory_space<vmem>>, %arg7: memref<1x8x32xf32, #tpu.memory_space<vmem>>, %arg8: memref<1x16x32xf32, #tpu.memory_space<vmem>>) attributes {dimension_semantics = [#tpu.dimension_semantics<parallel>], iteration_bounds = array<i64: 2>, scalar_prefetch = 0 : i64, scratch_operands = 0 : i64, tpu.core_type = #tpu.core_type<tc>, window_params = [{transform_indices = @transform_0, window_bounds = array<i64: 1, 8, 32>}, {transform_indices = @transform_1, window_bounds = array<i64: 1, 16, 32>}, {pipeline_mode = #tpu.pipeline_mode<synchronous>, transform_indices = @transform_2, window_bounds = array<i64: 32, 96>}, {pipeline_mode = #tpu.pipeline_mode<synchronous>, transform_indices = @transform_3, window_bounds = array<i64: 1, 96>}, {pipeline_mode = #tpu.pipeline_mode<synchronous>, transform_indices = @transform_4, window_bounds = array<i64: 32, 32>}, {pipeline_mode = #tpu.pipeline_mode<synchronous>, transform_indices = @transform_5, window_bounds = array<i64: 1, 32>}, {transform_indices = @transform_6, window_bounds = array<i64: 1, 8, 32>}, {transform_indices = @transform_7, window_bounds = array<i64: 1, 16, 32>}]} {
    %c0 = arith.constant 0 : index
    %c0_0 = arith.constant 0 : index
    %c0_1 = arith.constant 0 : index
    %0 = vector.load %arg1[%c0, %c0_0, %c0_1] : memref<1x8x32xf32, #tpu.memory_space<vmem>>, vector<1x8x32xf32>
    %1 = vector.shape_cast %0 : vector<1x8x32xf32> to vector<8x32xf32>
    %c0_2 = arith.constant 0 : index
    %c0_3 = arith.constant 0 : index
    %c0_4 = arith.constant 0 : index
    %2 = vector.load %arg2[%c0_2, %c0_3, %c0_4] : memref<1x16x32xf32, #tpu.memory_space<vmem>>, vector<1x16x32xf32>
    %3 = vector.shape_cast %2 : vector<1x16x32xf32> to vector<16x32xf32>
    %4 = tpu.concatenate %1, %3 in 0 : vector<8x32xf32>, vector<16x32xf32> -> vector<24x32xf32>
    %c0_5 = arith.constant 0 : index
    %c0_6 = arith.constant 0 : index
    %5 = vector.load %arg3[%c0_5, %c0_6] : memref<32x96xf32, #tpu.memory_space<vmem>>, vector<32x96xf32>
    %c0_7 = arith.constant 0 : index
    %c0_8 = arith.constant 0 : index
    %6 = vector.load %arg4[%c0_7, %c0_8] : memref<1x96xf32, #tpu.memory_space<vmem>>, vector<1x96xf32>
    %c0_9 = arith.constant 0 : index
    %c0_10 = arith.constant 0 : index
    %7 = vector.load %arg5[%c0_9, %c0_10] : memref<32x32xf32, #tpu.memory_space<vmem>>, vector<32x32xf32>
    %c0_11 = arith.constant 0 : index
    %c0_12 = arith.constant 0 : index
    %8 = vector.load %arg6[%c0_11, %c0_12] : memref<1x32xf32, #tpu.memory_space<vmem>>, vector<1x32xf32>
    %cst = arith.constant dense<0.000000e+00> : vector<24x96xf32>
    %9 = tpu.matmul %4, %5, %cst {dimension_numbers = #tpu.dot_dimension_numbers<[1], [0], [0], [1], [0, 0, 1, 1], [], []>} : vector<24x32xf32>, vector<32x96xf32>, vector<24x96xf32> -> vector<24x96xf32>
    %10 = vector.broadcast %6 : vector<1x96xf32> to vector<24x96xf32>
    %11 = arith.addf %9, %10 : vector<24x96xf32>
    %12 = vector.extract_strided_slice %11 {offsets = [0, 0], sizes = [24, 32], strides = [1, 1]} : vector<24x96xf32> to vector<24x32xf32>
    %13 = vector.extract_strided_slice %11 {offsets = [0, 32], sizes = [24, 32], strides = [1, 1]} : vector<24x96xf32> to vector<24x32xf32>
    %14 = vector.extract_strided_slice %11 {offsets = [0, 64], sizes = [24, 32], strides = [1, 1]} : vector<24x96xf32> to vector<24x32xf32>
    %15 = tpu.iota {dimensions = array<i32: 0>} : vector<24x24xi32>
    %16 = tpu.iota {dimensions = array<i32: 1>} : vector<24x24xi32>
    %c8_i32 = arith.constant 8 : i32
    %17 = vector.broadcast %c8_i32 : i32 to vector<24x24xi32>
    %18 = arith.cmpi slt, %15, %17 : vector<24x24xi32>
    %c8_i32_13 = arith.constant 8 : i32
    %19 = vector.broadcast %c8_i32_13 : i32 to vector<24x24xi32>
    %20 = arith.cmpi slt, %16, %19 : vector<24x24xi32>
    %21 = arith.xori %18, %20 : vector<24x24xi1>
    %22 = vector.extract_strided_slice %12 {offsets = [0, 0], sizes = [24, 8], strides = [1, 1]} : vector<24x32xf32> to vector<24x8xf32>
    %23 = vector.extract_strided_slice %13 {offsets = [0, 0], sizes = [24, 8], strides = [1, 1]} : vector<24x32xf32> to vector<24x8xf32>
    %24 = vector.extract_strided_slice %14 {offsets = [0, 0], sizes = [24, 8], strides = [1, 1]} : vector<24x32xf32> to vector<24x8xf32>
    %cst_14 = arith.constant dense<0.000000e+00> : vector<24x24xf32>
    %25 = tpu.matmul %22, %23, %cst_14 {dimension_numbers = #tpu.dot_dimension_numbers<[1], [1], [0], [0], [0, 0, 1, 0], [], []>} : vector<24x8xf32>, vector<24x8xf32>, vector<24x24xf32> -> vector<24x24xf32>
    %cst_15 = arith.constant 0.353553385 : f32
    %26 = vector.broadcast %cst_15 : f32 to vector<24x24xf32>
    %27 = arith.mulf %25, %26 : vector<24x24xf32>
    %cst_16 = arith.constant -1.000000e+30 : f32
    %28 = vector.broadcast %cst_16 : f32 to vector<24x24xf32>
    %29 = arith.select %21, %27, %28 : vector<24x24xi1>, vector<24x24xf32>
    %cst_17 = arith.constant dense<0xFF800000> : vector<24xf32>
    %30 = vector.multi_reduction <maximumf>, %29, %cst_17 [1] : vector<24x24xf32> to vector<24xf32>
    %31 = vector.shape_cast %30 : vector<24xf32> to vector<24x1xf32>
    %32 = vector.broadcast %31 : vector<24x1xf32> to vector<24x24xf32>
    %33 = arith.subf %29, %32 : vector<24x24xf32>
    %34 = math.exp %33 : vector<24x24xf32>
    %cst_18 = arith.constant dense<0.000000e+00> : vector<24xf32>
    %35 = vector.multi_reduction <add>, %34, %cst_18 [1] : vector<24x24xf32> to vector<24xf32>
    %36 = vector.shape_cast %35 : vector<24xf32> to vector<24x1xf32>
    %37 = vector.broadcast %36 : vector<24x1xf32> to vector<24x24xf32>
    %38 = arith.divf %34, %37 : vector<24x24xf32>
    %cst_19 = arith.constant dense<0.000000e+00> : vector<24x8xf32>
    %39 = tpu.matmul %38, %24, %cst_19 {dimension_numbers = #tpu.dot_dimension_numbers<[1], [0], [0], [1], [0, 0, 1, 1], [], []>} : vector<24x24xf32>, vector<24x8xf32>, vector<24x8xf32> -> vector<24x8xf32>
    %40 = vector.extract_strided_slice %12 {offsets = [0, 8], sizes = [24, 8], strides = [1, 1]} : vector<24x32xf32> to vector<24x8xf32>
    %41 = vector.extract_strided_slice %13 {offsets = [0, 8], sizes = [24, 8], strides = [1, 1]} : vector<24x32xf32> to vector<24x8xf32>
    %42 = vector.extract_strided_slice %14 {offsets = [0, 8], sizes = [24, 8], strides = [1, 1]} : vector<24x32xf32> to vector<24x8xf32>
    %cst_20 = arith.constant dense<0.000000e+00> : vector<24x24xf32>
    %43 = tpu.matmul %40, %41, %cst_20 {dimension_numbers = #tpu.dot_dimension_numbers<[1], [1], [0], [0], [0, 0, 1, 0], [], []>} : vector<24x8xf32>, vector<24x8xf32>, vector<24x24xf32> -> vector<24x24xf32>
    %cst_21 = arith.constant 0.353553385 : f32
    %44 = vector.broadcast %cst_21 : f32 to vector<24x24xf32>
    %45 = arith.mulf %43, %44 : vector<24x24xf32>
    %cst_22 = arith.constant -1.000000e+30 : f32
    %46 = vector.broadcast %cst_22 : f32 to vector<24x24xf32>
    %47 = arith.select %21, %45, %46 : vector<24x24xi1>, vector<24x24xf32>
    %cst_23 = arith.constant dense<0xFF800000> : vector<24xf32>
    %48 = vector.multi_reduction <maximumf>, %47, %cst_23 [1] : vector<24x24xf32> to vector<24xf32>
    %49 = vector.shape_cast %48 : vector<24xf32> to vector<24x1xf32>
    %50 = vector.broadcast %49 : vector<24x1xf32> to vector<24x24xf32>
    %51 = arith.subf %47, %50 : vector<24x24xf32>
    %52 = math.exp %51 : vector<24x24xf32>
    %cst_24 = arith.constant dense<0.000000e+00> : vector<24xf32>
    %53 = vector.multi_reduction <add>, %52, %cst_24 [1] : vector<24x24xf32> to vector<24xf32>
    %54 = vector.shape_cast %53 : vector<24xf32> to vector<24x1xf32>
    %55 = vector.broadcast %54 : vector<24x1xf32> to vector<24x24xf32>
    %56 = arith.divf %52, %55 : vector<24x24xf32>
    %cst_25 = arith.constant dense<0.000000e+00> : vector<24x8xf32>
    %57 = tpu.matmul %56, %42, %cst_25 {dimension_numbers = #tpu.dot_dimension_numbers<[1], [0], [0], [1], [0, 0, 1, 1], [], []>} : vector<24x24xf32>, vector<24x8xf32>, vector<24x8xf32> -> vector<24x8xf32>
    %58 = vector.extract_strided_slice %12 {offsets = [0, 16], sizes = [24, 8], strides = [1, 1]} : vector<24x32xf32> to vector<24x8xf32>
    %59 = vector.extract_strided_slice %13 {offsets = [0, 16], sizes = [24, 8], strides = [1, 1]} : vector<24x32xf32> to vector<24x8xf32>
    %60 = vector.extract_strided_slice %14 {offsets = [0, 16], sizes = [24, 8], strides = [1, 1]} : vector<24x32xf32> to vector<24x8xf32>
    %cst_26 = arith.constant dense<0.000000e+00> : vector<24x24xf32>
    %61 = tpu.matmul %58, %59, %cst_26 {dimension_numbers = #tpu.dot_dimension_numbers<[1], [1], [0], [0], [0, 0, 1, 0], [], []>} : vector<24x8xf32>, vector<24x8xf32>, vector<24x24xf32> -> vector<24x24xf32>
    %cst_27 = arith.constant 0.353553385 : f32
    %62 = vector.broadcast %cst_27 : f32 to vector<24x24xf32>
    %63 = arith.mulf %61, %62 : vector<24x24xf32>
    %cst_28 = arith.constant -1.000000e+30 : f32
    %64 = vector.broadcast %cst_28 : f32 to vector<24x24xf32>
    %65 = arith.select %21, %63, %64 : vector<24x24xi1>, vector<24x24xf32>
    %cst_29 = arith.constant dense<0xFF800000> : vector<24xf32>
    %66 = vector.multi_reduction <maximumf>, %65, %cst_29 [1] : vector<24x24xf32> to vector<24xf32>
    %67 = vector.shape_cast %66 : vector<24xf32> to vector<24x1xf32>
    %68 = vector.broadcast %67 : vector<24x1xf32> to vector<24x24xf32>
    %69 = arith.subf %65, %68 : vector<24x24xf32>
    %70 = math.exp %69 : vector<24x24xf32>
    %cst_30 = arith.constant dense<0.000000e+00> : vector<24xf32>
    %71 = vector.multi_reduction <add>, %70, %cst_30 [1] : vector<24x24xf32> to vector<24xf32>
    %72 = vector.shape_cast %71 : vector<24xf32> to vector<24x1xf32>
    %73 = vector.broadcast %72 : vector<24x1xf32> to vector<24x24xf32>
    %74 = arith.divf %70, %73 : vector<24x24xf32>
    %cst_31 = arith.constant dense<0.000000e+00> : vector<24x8xf32>
    %75 = tpu.matmul %74, %60, %cst_31 {dimension_numbers = #tpu.dot_dimension_numbers<[1], [0], [0], [1], [0, 0, 1, 1], [], []>} : vector<24x24xf32>, vector<24x8xf32>, vector<24x8xf32> -> vector<24x8xf32>
    %76 = vector.extract_strided_slice %12 {offsets = [0, 24], sizes = [24, 8], strides = [1, 1]} : vector<24x32xf32> to vector<24x8xf32>
    %77 = vector.extract_strided_slice %13 {offsets = [0, 24], sizes = [24, 8], strides = [1, 1]} : vector<24x32xf32> to vector<24x8xf32>
    %78 = vector.extract_strided_slice %14 {offsets = [0, 24], sizes = [24, 8], strides = [1, 1]} : vector<24x32xf32> to vector<24x8xf32>
    %cst_32 = arith.constant dense<0.000000e+00> : vector<24x24xf32>
    %79 = tpu.matmul %76, %77, %cst_32 {dimension_numbers = #tpu.dot_dimension_numbers<[1], [1], [0], [0], [0, 0, 1, 0], [], []>} : vector<24x8xf32>, vector<24x8xf32>, vector<24x24xf32> -> vector<24x24xf32>
    %cst_33 = arith.constant 0.353553385 : f32
    %80 = vector.broadcast %cst_33 : f32 to vector<24x24xf32>
    %81 = arith.mulf %79, %80 : vector<24x24xf32>
    %cst_34 = arith.constant -1.000000e+30 : f32
    %82 = vector.broadcast %cst_34 : f32 to vector<24x24xf32>
    %83 = arith.select %21, %81, %82 : vector<24x24xi1>, vector<24x24xf32>
    %cst_35 = arith.constant dense<0xFF800000> : vector<24xf32>
    %84 = vector.multi_reduction <maximumf>, %83, %cst_35 [1] : vector<24x24xf32> to vector<24xf32>
    %85 = vector.shape_cast %84 : vector<24xf32> to vector<24x1xf32>
    %86 = vector.broadcast %85 : vector<24x1xf32> to vector<24x24xf32>
    %87 = arith.subf %83, %86 : vector<24x24xf32>
    %88 = math.exp %87 : vector<24x24xf32>
    %cst_36 = arith.constant dense<0.000000e+00> : vector<24xf32>
    %89 = vector.multi_reduction <add>, %88, %cst_36 [1] : vector<24x24xf32> to vector<24xf32>
    %90 = vector.shape_cast %89 : vector<24xf32> to vector<24x1xf32>
    %91 = vector.broadcast %90 : vector<24x1xf32> to vector<24x24xf32>
    %92 = arith.divf %88, %91 : vector<24x24xf32>
    %cst_37 = arith.constant dense<0.000000e+00> : vector<24x8xf32>
    %93 = tpu.matmul %92, %78, %cst_37 {dimension_numbers = #tpu.dot_dimension_numbers<[1], [0], [0], [1], [0, 0, 1, 1], [], []>} : vector<24x24xf32>, vector<24x8xf32>, vector<24x8xf32> -> vector<24x8xf32>
    %94 = tpu.concatenate %39, %57, %75, %93 in 1 : vector<24x8xf32>, vector<24x8xf32>, vector<24x8xf32>, vector<24x8xf32> -> vector<24x32xf32>
    %cst_38 = arith.constant dense<0.000000e+00> : vector<24x32xf32>
    %95 = tpu.matmul %94, %7, %cst_38 {dimension_numbers = #tpu.dot_dimension_numbers<[1], [0], [0], [1], [0, 0, 1, 1], [], []>} : vector<24x32xf32>, vector<32x32xf32>, vector<24x32xf32> -> vector<24x32xf32>
    %96 = vector.broadcast %8 : vector<1x32xf32> to vector<24x32xf32>
    %97 = arith.addf %95, %96 : vector<24x32xf32>
    %98 = vector.extract_strided_slice %97 {offsets = [0, 0], sizes = [8, 32], strides = [1, 1]} : vector<24x32xf32> to vector<8x32xf32>
    %c0_39 = arith.constant 0 : index
    %c0_40 = arith.constant 0 : index
    %c0_41 = arith.constant 0 : index
    %99 = vector.load %arg7[%c0_39, %c0_40, %c0_41] : memref<1x8x32xf32, #tpu.memory_space<vmem>>, vector<1x8x32xf32>
    %100 = vector.shape_cast %99 : vector<1x8x32xf32> to vector<8x32xf32>
    %101 = vector.shape_cast %98 : vector<8x32xf32> to vector<1x8x32xf32>
    tpu.vector_store %arg7[%c0_39, %c0_40, %c0_41], %101 {strides = array<i32>} : memref<1x8x32xf32, #tpu.memory_space<vmem>>, vector<1x8x32xf32>,
    %102 = vector.extract_strided_slice %97 {offsets = [8, 0], sizes = [16, 32], strides = [1, 1]} : vector<24x32xf32> to vector<16x32xf32>
    %c0_42 = arith.constant 0 : index
    %c0_43 = arith.constant 0 : index
    %c0_44 = arith.constant 0 : index
    %103 = vector.load %arg8[%c0_42, %c0_43, %c0_44] : memref<1x16x32xf32, #tpu.memory_space<vmem>>, vector<1x16x32xf32>
    %104 = vector.shape_cast %103 : vector<1x16x32xf32> to vector<16x32xf32>
    %105 = vector.shape_cast %102 : vector<16x32xf32> to vector<1x16x32xf32>
    tpu.vector_store %arg8[%c0_42, %c0_43, %c0_44], %105 {strides = array<i32>} : memref<1x16x32xf32, #tpu.memory_space<vmem>>, vector<1x16x32xf32>,
    return
  }
  func.func @transform_0(%arg0: i32) -> (i32, i32, i32) {
    %c0_i32 = arith.constant 0 : i32
    %c0_i32_0 = arith.constant 0 : i32
    %c0_i32_1 = arith.constant 0 : i32
    return %arg0, %c0_i32, %c0_i32_0 : i32, i32, i32
  }
  func.func @transform_1(%arg0: i32) -> (i32, i32, i32) {
    %c0_i32 = arith.constant 0 : i32
    %c0_i32_0 = arith.constant 0 : i32
    %c0_i32_1 = arith.constant 0 : i32
    return %arg0, %c0_i32, %c0_i32_0 : i32, i32, i32
  }
  func.func @transform_2(%arg0: i32) -> (i32, i32) {
    %c0_i32 = arith.constant 0 : i32
    %c0_i32_0 = arith.constant 0 : i32
    %c0_i32_1 = arith.constant 0 : i32
    return %c0_i32, %c0_i32_0 : i32, i32
  }
  func.func @transform_3(%arg0: i32) -> (i32, i32) {
    %c0_i32 = arith.constant 0 : i32
    %c0_i32_0 = arith.constant 0 : i32
    %c0_i32_1 = arith.constant 0 : i32
    return %c0_i32, %c0_i32_0 : i32, i32
  }
  func.func @transform_4(%arg0: i32) -> (i32, i32) {
    %c0_i32 = arith.constant 0 : i32
    %c0_i32_0 = arith.constant 0 : i32
    %c0_i32_1 = arith.constant 0 : i32
    return %c0_i32, %c0_i32_0 : i32, i32
  }
  func.func @transform_5(%arg0: i32) -> (i32, i32) {
    %c0_i32 = arith.constant 0 : i32
    %c0_i32_0 = arith.constant 0 : i32
    %c0_i32_1 = arith.constant 0 : i32
    return %c0_i32, %c0_i32_0 : i32, i32
  }
  func.func @transform_6(%arg0: i32) -> (i32, i32, i32) {
    %c0_i32 = arith.constant 0 : i32
    %c0_i32_0 = arith.constant 0 : i32
    %c0_i32_1 = arith.constant 0 : i32
    return %arg0, %c0_i32, %c0_i32_0 : i32, i32, i32
  }
  func.func @transform_7(%arg0: i32) -> (i32, i32, i32) {
    %c0_i32 = arith.constant 0 : i32
    %c0_i32_0 = arith.constant 0 : i32
    %c0_i32_1 = arith.constant 0 : i32
    return %arg0, %c0_i32, %c0_i32_0 : i32, i32, i32
  }
}

</mosaic_0001>

<llo_original>
// kernel: tpu_custom_call.1
$region0: #{tpu_custom_call.1}
  #allocation0 [shape = 'u32[]', space=smem, size = 0x4, offset = 0x4, fixed_abs, tag = 'smem constant byte address 0x4 - core index']
  #allocation1 [shape = 'u32[72,128]{1,0:T(1,128)}', space=vmem, size = 0x9000, scoped, tag = 'internal scratch']
  %s0 = inlined_call_operand.hbm [shape: f32[2,8,32], index: 0, kind: input, shape index: {}]
  %s1 = inlined_call_operand.hbm [shape: f32[2,16,32], index: 1, kind: input, shape index: {}]
  %s2 = inlined_call_operand.hbm [shape: f32[32,96], index: 2, kind: input, shape index: {}]
  %s3 = inlined_call_operand.vmem [shape: f32[1,96], index: 3, kind: input, shape index: {}]
  %s4 = inlined_call_operand.hbm [shape: f32[32,32], index: 4, kind: input, shape index: {}]
  %s5 = inlined_call_operand.vmem [shape: f32[1,32], index: 5, kind: input, shape index: {}]
  %s6 = inlined_call_operand.hbm [shape: f32[2,8,32], index: 6, kind: output, shape index: {0}]
  %s7 = inlined_call_operand.hbm [shape: f32[2,16,32], index: 7, kind: output, shape index: {1}]
  %8 = xla_tuple %s6, %s7
  %s9 = sld [smem:[#allocation0]]
  $region81: #{tpu_custom_call.1} parent=0
    _
  %s11 = ssub.s32 1, %s9
  %s12 = scalar_select 0, %s11, %s9
  $region1: #{tpu_custom_call.1} parent=0
    #allocation2 [shape = 'u8[8192]{0}', space=vmem, size = 0x2000, scoped, tag = 'input window, operand 0']
    #allocation3 [shape = 's32[2]{0}', space=sflag, size = 0x8, scoped, tag = 'scoped memory for tpu_custom_call.1']
    #allocation4 [shape = 's32[2]{0}', space=sflag, size = 0x8, scoped, tag = 'scoped memory for tpu_custom_call.1']
    #allocation5 [shape = 'u8[16384]{0}', space=vmem, size = 0x4000, scoped, tag = 'input window, operand 1']
    #allocation6 [shape = 's32[2]{0}', space=sflag, size = 0x8, scoped, tag = 'scoped memory for tpu_custom_call.1']
    #allocation7 [shape = 'u8[16384]{0}', space=vmem, size = 0x4000, scoped, tag = 'input window, operand 2, single buffered']
    #allocation8 [shape = 'u8[16384]{0}', space=vmem, size = 0x4000, scoped, tag = 'input window, operand 4, single buffered']
    #allocation9 [shape = 's32[1]{0}', space=sflag, size = 0x4, scoped, tag = 'scoped memory for tpu_custom_call.1']
    #allocation10 [shape = 'u8[8192]{0}', space=vmem, size = 0x2000, scoped, tag = 'output window, operand 0']
    #allocation11 [shape = 'u8[16384]{0}', space=vmem, size = 0x4000, scoped, tag = 'output window, operand 1']
    #allocation12 [shape = 's32[2]{0}', space=sflag, size = 0x8, scoped, tag = 'scoped memory for tpu_custom_call.1']
    %13 = vsyncpa [#allocation3], 0
    %s14 = scalar_lea.sflag [#allocation3], 1
    %15 = vsyncpa %s14, 0
    %16 = vsyncpa [#allocation6], 0
    %s17 = scalar_lea.sflag [#allocation6], 1
    %18 = vsyncpa %s17, 0
    %19 = vsyncpa [#allocation9], 0
    %20 = vsyncpa [#allocation4], 0
    %s21 = scalar_lea.sflag [#allocation4], 1
    %22 = vsyncpa %s21, 0
    %23 = vsyncpa [#allocation12], 0
    %s24 = scalar_lea.sflag [#allocation12], 1
    %25 = vsyncpa %s24, 0
    loop: start=0, step=1, limit=4
    $region2: #{tpu_custom_call.1} parent=1 // loop_pre_header
      _
    $region3: #{tpu_custom_call.1} parent=1 // loop_header
      %s27 = sphi 0, %s31
      %p28 = scmp.ge.s32.totalorder %s27, 4
      %s37 = sphi 0, %s39
      %s40 = sphi 0, %s37
      %s41 = sphi 0, %s40
      %s57 = sphi 0, %s41
      %s63 = sphi 0, %s65
      %s66 = sphi 0, %s63
      %s67 = sphi 0, %s66
      %s83 = sphi 0, %s67
      %s87 = sphi 0, %s87
      %s89 = sphi 0, %s87
      %s90 = sphi 0, %s89
      %s104 = sphi 0, %s90
      %s108 = sphi 0, %s108
      %s110 = sphi 0, %s108
      %s111 = sphi 0, %s110
      %s125 = sphi 0, %s111
      %s129 = sphi 0, %s129
      %s131 = sphi 0, %s129
      %s132 = sphi 0, %s131
      %s146 = sphi 0, %s132
      %s150 = sphi 0, %s150
      %s152 = sphi 0, %s150
      %s153 = sphi 0, %s152
      %s167 = sphi 0, %s153
      %s173 = sphi 0, %s175
      %s176 = sphi 0, %s173
      %s177 = sphi 0, %s176
      %s193 = sphi 0, %s177
      %s199 = sphi 0, %s201
      %s202 = sphi 0, %s199
      %s203 = sphi 0, %s202
      %s219 = sphi 0, %s203
    $region4: #{tpu_custom_call.1} parent=1 // loop_header_branch
      %30 = sbr.rel (%p28) target = $region8
    $region5: #{tpu_custom_call.1} parent=1 // loop_body
      %s32 = ssub.s32 %s27, 1
      %s33 = ssub.s32 %s27, 2
      %s34 = sadd.s32 %s27, 1
      %s35 = ssub.s32 %s27, %s34
      %p36 = scmp.eq.s32.totalorder %s35, 0
      %s38 = sadd.s32 %s37, 1
      %s39 = scalar_select %p36, %s37, %s38
      %p42 = pneg %p36
      %p43 = scmp.eq.s32.totalorder %s27, 1
      %p44 = por %p42, %p43
      %p45 = scmp.ne.s32.totalorder %s37, %s40
      %p46 = scmp.eq.s32.totalorder %s27, 0
      %p47 = por %p45, %p46
      %p48 = scmp.ne.s32.totalorder %s37, %s40
      %p49 = scmp.eq.s32.totalorder %s32, 1
      %p50 = por %p48, %p49
      %p51 = scmp.ne.s32.totalorder %s40, %s41
      %p52 = scmp.eq.s32.totalorder %s32, 0
      %p53 = por %p51, %p52
      %p54 = scmp.ne.s32.totalorder %s40, %s41
      %p55 = scmp.eq.s32.totalorder %s33, 1
      %p56 = por %p54, %p55
      %p58 = scmp.ne.s32.totalorder %s41, %s57
      %p59 = scmp.eq.s32.totalorder %s33, 0
      %p60 = por %p58, %p59
      %s61 = ssub.s32 %s27, %s34
      %p62 = scmp.eq.s32.totalorder %s61, 0
      %s64 = sadd.s32 %s63, 1
      %s65 = scalar_select %p62, %s63, %s64
      %p68 = pneg %p62
      %p69 = scmp.eq.s32.totalorder %s27, 1
      %p70 = por %p68, %p69
      %p71 = scmp.ne.s32.totalorder %s63, %s66
      %p72 = scmp.eq.s32.totalorder %s27, 0
      %p73 = por %p71, %p72
      %p74 = scmp.ne.s32.totalorder %s63, %s66
      %p75 = scmp.eq.s32.totalorder %s32, 1
      %p76 = por %p74, %p75
      %p77 = scmp.ne.s32.totalorder %s66, %s67
      %p78 = scmp.eq.s32.totalorder %s32, 0
      %p79 = por %p77, %p78
      %p80 = scmp.ne.s32.totalorder %s66, %s67
      %p81 = scmp.eq.s32.totalorder %s33, 1
      %p82 = por %p80, %p81
      %p84 = scmp.ne.s32.totalorder %s67, %s83
      %p85 = scmp.eq.s32.totalorder %s33, 0
      %p86 = por %p84, %p85
      %s88 = sadd.s32 %s87, 1
      %p91 = scmp.eq.s32.totalorder %s27, 1
      %p92 = scmp.ne.s32.totalorder %s87, %s89
      %p93 = scmp.eq.s32.totalorder %s27, 0
      %p94 = por %p92, %p93
      %p95 = scmp.ne.s32.totalorder %s87, %s89
      %p96 = scmp.eq.s32.totalorder %s32, 1
      %p97 = por %p95, %p96
      %p98 = scmp.ne.s32.totalorder %s89, %s90
      %p99 = scmp.eq.s32.totalorder %s32, 0
      %p100 = por %p98, %p99
      %p101 = scmp.ne.s32.totalorder %s89, %s90
      %p102 = scmp.eq.s32.totalorder %s33, 1
      %p103 = por %p101, %p102
      %p105 = scmp.ne.s32.totalorder %s90, %s104
      %p106 = scmp.eq.s32.totalorder %s33, 0
      %p107 = por %p105, %p106
      %s109 = sadd.s32 %s108, 1
      %p112 = scmp.eq.s32.totalorder %s27, 1
      %p113 = scmp.ne.s32.totalorder %s108, %s110
      %p114 = scmp.eq.s32.totalorder %s27, 0
      %p115 = por %p113, %p114
      %p116 = scmp.ne.s32.totalorder %s108, %s110
      %p117 = scmp.eq.s32.totalorder %s32, 1
      %p118 = por %p116, %p117
      %p119 = scmp.ne.s32.totalorder %s110, %s111
      %p120 = scmp.eq.s32.totalorder %s32, 0
      %p121 = por %p119, %p120
      %p122 = scmp.ne.s32.totalorder %s110, %s111
      %p123 = scmp.eq.s32.totalorder %s33, 1
      %p124 = por %p122, %p123
      %p126 = scmp.ne.s32.totalorder %s111, %s125
      %p127 = scmp.eq.s32.totalorder %s33, 0
      %p128 = por %p126, %p127
      %s130 = sadd.s32 %s129, 1
      %p133 = scmp.eq.s32.totalorder %s27, 1
      %p134 = scmp.ne.s32.totalorder %s129, %s131
      %p135 = scmp.eq.s32.totalorder %s27, 0
      %p136 = por %p134, %p135
      %p137 = scmp.ne.s32.totalorder %s129, %s131
      %p138 = scmp.eq.s32.totalorder %s32, 1
      %p139 = por %p137, %p138
      %p140 = scmp.ne.s32.totalorder %s131, %s132
      %p141 = scmp.eq.s32.totalorder %s32, 0
      %p142 = por %p140, %p141
      %p143 = scmp.ne.s32.totalorder %s131, %s132
      %p144 = scmp.eq.s32.totalorder %s33, 1
      %p145 = por %p143, %p144
      %p147 = scmp.ne.s32.totalorder %s132, %s146
      %p148 = scmp.eq.s32.totalorder %s33, 0
      %p149 = por %p147, %p148
      %s151 = sadd.s32 %s150, 1
      %p154 = scmp.eq.s32.totalorder %s27, 1
      %p155 = scmp.ne.s32.totalorder %s150, %s152
      %p156 = scmp.eq.s32.totalorder %s27, 0
      %p157 = por %p155, %p156
      %p158 = scmp.ne.s32.totalorder %s150, %s152
      %p159 = scmp.eq.s32.totalorder %s32, 1
      %p160 = por %p158, %p159
      %p161 = scmp.ne.s32.totalorder %s152, %s153
      %p162 = scmp.eq.s32.totalorder %s32, 0
      %p163 = por %p161, %p162
      %p164 = scmp.ne.s32.totalorder %s152, %s153
      %p165 = scmp.eq.s32.totalorder %s33, 1
      %p166 = por %p164, %p165
      %p168 = scmp.ne.s32.totalorder %s153, %s167
      %p169 = scmp.eq.s32.totalorder %s33, 0
      %p170 = por %p168, %p169
      %s171 = ssub.s32 %s27, %s34
      %p172 = scmp.eq.s32.totalorder %s171, 0
      %s174 = sadd.s32 %s173, 1
      %s175 = scalar_select %p172, %s173, %s174
      %p178 = pneg %p172
      %p179 = scmp.eq.s32.totalorder %s27, 1
      %p180 = por %p178, %p179
      %p181 = scmp.ne.s32.totalorder %s173, %s176
      %p182 = scmp.eq.s32.totalorder %s27, 0
      %p183 = por %p181, %p182
      %p184 = scmp.ne.s32.totalorder %s173, %s176
      %p185 = scmp.eq.s32.totalorder %s32, 1
      %p186 = por %p184, %p185
      %p187 = scmp.ne.s32.totalorder %s176, %s177
      %p188 = scmp.eq.s32.totalorder %s32, 0
      %p189 = por %p187, %p188
      %p190 = scmp.ne.s32.totalorder %s176, %s177
      %p191 = scmp.eq.s32.totalorder %s33, 1
      %p192 = por %p190, %p191
      %p194 = scmp.ne.s32.totalorder %s177, %s193
      %p195 = scmp.eq.s32.totalorder %s33, 0
      %p196 = por %p194, %p195
      %s197 = ssub.s32 %s27, %s34
      %p198 = scmp.eq.s32.totalorder %s197, 0
      %s200 = sadd.s32 %s199, 1
      %s201 = scalar_select %p198, %s199, %s200
      %p204 = pneg %p198
      %p205 = scmp.eq.s32.totalorder %s27, 1
      %p206 = por %p204, %p205
      %p207 = scmp.ne.s32.totalorder %s199, %s202
      %p208 = scmp.eq.s32.totalorder %s27, 0
      %p209 = por %p207, %p208
      %p210 = scmp.ne.s32.totalorder %s199, %s202
      %p211 = scmp.eq.s32.totalorder %s32, 1
      %p212 = por %p210, %p211
      %p213 = scmp.ne.s32.totalorder %s202, %s203
      %p214 = scmp.eq.s32.totalorder %s32, 0
      %p215 = por %p213, %p214
      %p216 = scmp.ne.s32.totalorder %s202, %s203
      %p217 = scmp.eq.s32.totalorder %s33, 1
      %p218 = por %p216, %p217
      %p220 = scmp.ne.s32.totalorder %s203, %s219
      %p221 = scmp.eq.s32.totalorder %s33, 0
      %p222 = por %p220, %p221
      %p223 = scmp.le.s32.totalorder 1, %s27
      %p224 = scmp.lt.s32.totalorder %s27, 3
      %p225 = pnand %p223, %p224
      %p226 = pneg %p225
      // Predicated region
      $region9: #{tpu_custom_call.1} parent=5 // pred_check
        _
      $region10: #{tpu_custom_call.1} parent=5 // pred_check_branch
        %228 = sbr.rel (%p225) target = $region12
      $region11: #{tpu_custom_call.1} parent=5 // pred_region
        %s229 = ssub.s32 %s27, 1
        // Predicated region
        $region13: #{tpu_custom_call.1} parent=11 // pred_check
          %p230 = pneg %p100
        $region14: #{tpu_custom_call.1} parent=11 // pred_check_branch
          %232 = sbr.rel (%p230) target = $region16
        $region15: #{tpu_custom_call.1} parent=11 // pred_region
          %234 = vsyncadd [#allocation6], 0
          %s235 = sshll.u32 %s2, 4
          %s236 = int_to_ptr.hbm [resolvable:$true] %s235
          %s237 = sshll.u32 [#allocation7], 4
          %s238 = int_to_ptr.vmem [resolvable:$true] %s237
          %243 = dma.hbm_to_vmem [thread:$0]  %s236, 512, %s238, [#allocation6], 128, 128, 8
        $region16: #{tpu_custom_call.1} parent=11 // pred_fallthru
          _
        // Predicated region
        $region17: #{tpu_custom_call.1} parent=11 // pred_check
          %p244 = pneg %p121
        $region18: #{tpu_custom_call.1} parent=11 // pred_check_branch
          %246 = sbr.rel (%p244) target = $region20
        $region19: #{tpu_custom_call.1} parent=11 // pred_region
          _
        $region20: #{tpu_custom_call.1} parent=11 // pred_fallthru
          _
        // Predicated region
        $region21: #{tpu_custom_call.1} parent=11 // pred_check
          %p247 = pneg %p142
        $region22: #{tpu_custom_call.1} parent=11 // pred_check_branch
          %249 = sbr.rel (%p247) target = $region24
        $region23: #{tpu_custom_call.1} parent=11 // pred_region
          %251 = vsyncadd [#allocation9], 0
          %s252 = sshll.u32 %s4, 4
          %s253 = int_to_ptr.hbm [resolvable:$true] %s252
          %s254 = sshll.u32 [#allocation8], 4
          %s255 = int_to_ptr.vmem [resolvable:$true] %s254
          %260 = dma.hbm_to_vmem [thread:$0]  %s253, 512, %s255, [#allocation9], 128, 128, 8
        $region24: #{tpu_custom_call.1} parent=11 // pred_fallthru
          _
        // Predicated region
        $region25: #{tpu_custom_call.1} parent=11 // pred_check
          %p261 = pneg %p163
        $region26: #{tpu_custom_call.1} parent=11 // pred_check_branch
          %263 = sbr.rel (%p261) target = $region28
        $region27: #{tpu_custom_call.1} parent=11 // pred_region
          _
        $region28: #{tpu_custom_call.1} parent=11 // pred_fallthru
          _
      $region12: #{tpu_custom_call.1} parent=5 // pred_fallthru
        _
      %p264 = scmp.lt.s32.totalorder %s27, 2
      // Predicated region
      $region29: #{tpu_custom_call.1} parent=5 // pred_check
        %p265 = pneg %p264
      $region30: #{tpu_custom_call.1} parent=5 // pred_check_branch
        %267 = sbr.rel (%p265) target = $region32
      $region31: #{tpu_custom_call.1} parent=5 // pred_region
        // Predicated region
        $region33: #{tpu_custom_call.1} parent=31 // pred_check
          %p268 = pneg %p47
        $region34: #{tpu_custom_call.1} parent=31 // pred_check_branch
          %270 = sbr.rel (%p268) target = $region36
        $region35: #{tpu_custom_call.1} parent=31 // pred_region
          %s271 = sand.u32 %s37, 1
          %s272 = scalar_lea.sflag [#allocation3], %s271
          %s273 = sand.u32 %s37, 1
          %s274 = smul.addr %s273, 8
          %s275 = scalar_lea.vmem [#allocation2], %s274
          %277 = vsyncadd %s272, 0
          %s278 = smul.addr %s27, 8
          %s279 = scalar_lea.hbm %s0, %s278
          %s281 = sshll.u32 %s279, 4
          %s282 = int_to_ptr.hbm [resolvable:$true] %s281
          %s283 = sshll.u32 %s275, 4
          %s284 = int_to_ptr.vmem [resolvable:$true] %s283
          %286 = dma.hbm_to_vmem [thread:$0]  %s282, 128, %s284, %s272
        $region36: #{tpu_custom_call.1} parent=31 // pred_fallthru
          _
        // Predicated region
        $region37: #{tpu_custom_call.1} parent=31 // pred_check
          %p287 = pneg %p73
        $region38: #{tpu_custom_call.1} parent=31 // pred_check_branch
          %289 = sbr.rel (%p287) target = $region40
        $region39: #{tpu_custom_call.1} parent=31 // pred_region
          %s290 = sand.u32 %s27, 1
          %s291 = scalar_lea.sflag [#allocation6], %s290
          %s292 = sand.u32 %s63, 1
          %s293 = smul.addr %s292, 16
          %s294 = scalar_lea.vmem [#allocation5], %s293
          %296 = vsyncadd %s291, 0
          %s297 = smul.addr %s27, 2
          %s298 = smul.addr %s297, 8
          %s299 = scalar_lea.hbm %s1, %s298
          %s300 = sshll.u32 %s299, 4
          %s301 = int_to_ptr.hbm [resolvable:$true] %s300
          %s302 = sshll.u32 %s294, 4
          %s303 = int_to_ptr.vmem [resolvable:$true] %s302
          %308 = dma.hbm_to_vmem [thread:$0]  %s301, 256, %s303, %s291, 128, 128, 8
        $region40: #{tpu_custom_call.1} parent=31 // pred_fallthru
          _
      $region32: #{tpu_custom_call.1} parent=5 // pred_fallthru
        _
      %p309 = scmp.le.s32.totalorder 1, %s27
      %p310 = scmp.lt.s32.totalorder %s27, 3
      %p311 = pnand %p309, %p310
      %p312 = pneg %p311
      // Predicated region
      $region41: #{tpu_custom_call.1} parent=5 // pred_check
        _
      $region42: #{tpu_custom_call.1} parent=5 // pred_check_branch
        %314 = sbr.rel (%p311) target = $region44
      $region43: #{tpu_custom_call.1} parent=5 // pred_region
        %s315 = ssub.s32 %s27, 1
        %s316 = sand.u32 %s40, 1
        %s317 = scalar_lea.sflag [#allocation3], %s316
        %s318 = sand.u32 %s40, 1
        %s319 = smul.addr %s318, 8
        %s320 = scalar_lea.vmem [#allocation2], %s319
        // Predicated region
        $region45: #{tpu_custom_call.1} parent=43 // pred_check
          %p321 = pneg %p53
        $region46: #{tpu_custom_call.1} parent=43 // pred_check_branch
          %323 = sbr.rel (%p321) target = $region48
        $region47: #{tpu_custom_call.1} parent=43 // pred_region
          %325 = dma.done %s317, 128
        $region48: #{tpu_custom_call.1} parent=43 // pred_fallthru
          _
        %s326 = sand.u32 %s32, 1
        %s327 = scalar_lea.sflag [#allocation6], %s326
        %s328 = sand.u32 %s66, 1
        %s329 = smul.addr %s328, 16
        %s330 = scalar_lea.vmem [#allocation5], %s329
        // Predicated region
        $region49: #{tpu_custom_call.1} parent=43 // pred_check
          %p331 = pneg %p79
        $region50: #{tpu_custom_call.1} parent=43 // pred_check_branch
          %333 = sbr.rel (%p331) target = $region52
        $region51: #{tpu_custom_call.1} parent=43 // pred_region
          %335 = dma.done %s327, 256
        $region52: #{tpu_custom_call.1} parent=43 // pred_fallthru
          _
        // Predicated region
        $region53: #{tpu_custom_call.1} parent=43 // pred_check
          %p336 = pneg %p100
        $region54: #{tpu_custom_call.1} parent=43 // pred_check_branch
          %338 = sbr.rel (%p336) target = $region56
        $region55: #{tpu_custom_call.1} parent=43 // pred_region
          %340 = dma.done [#allocation6], 512
        $region56: #{tpu_custom_call.1} parent=43 // pred_fallthru
          _
        // Predicated region
        $region57: #{tpu_custom_call.1} parent=43 // pred_check
          %p341 = pneg %p142
        $region58: #{tpu_custom_call.1} parent=43 // pred_check_branch
          %343 = sbr.rel (%p341) target = $region60
        $region59: #{tpu_custom_call.1} parent=43 // pred_region
          %345 = dma.done [#allocation9], 512
        $region60: #{tpu_custom_call.1} parent=43 // pred_fallthru
          _
        %s346 = sand.u32 %s40, 1
        %s347 = scalar_lea.sflag [#allocation3], %s346
        %s348 = sand.u32 %s40, 1
        %s349 = smul.addr %s348, 8
        %s350 = scalar_lea.vmem [#allocation2], %s349
        %p351 = pneg %p53
        %p352 = pneg %p50
        %s353 = sand.u32 %s32, 1
        %s354 = scalar_lea.sflag [#allocation6], %s353
        %s355 = sand.u32 %s66, 1
        %s356 = smul.addr %s355, 16
        %s357 = scalar_lea.vmem [#allocation5], %s356
        %p358 = pneg %p79
        %p359 = pneg %p76
        %p360 = pneg %p100
        %p361 = pneg %p97
        %p362 = pneg %p121
        %p363 = pneg %p118
        %p364 = pneg %p142
        %p365 = pneg %p139
        %p366 = pneg %p163
        %p367 = pneg %p160
        %p368 = pneg %p189
        %p369 = pneg %p186
        %s370 = sand.u32 %s176, 1
        %s371 = scalar_lea.sflag [#allocation4], %s370
        %s372 = sand.u32 %s176, 1
        %s373 = smul.addr %s372, 8
        %s374 = scalar_lea.vmem [#allocation10], %s373
        %p375 = pneg %p215
        %p376 = pneg %p212
        %s377 = sand.u32 %s202, 1
        %s378 = scalar_lea.sflag [#allocation12], %s377
        %s379 = sand.u32 %s202, 1
        %s380 = smul.addr %s379, 16
        %s381 = scalar_lea.vmem [#allocation11], %s380
        %v382 = vld [vmem:[%s320] sm:$0xff]
        %v383 = vld [vmem:[%s330] sm:$0xff]
        %v384 = vld [vmem:[%s330 + $0x8] sm:$0xff]
        %v385 = vld [vmem:[#allocation7] sm:$0xff]
        %v386 = vld [vmem:[#allocation7 + $0x8] sm:$0xff]
        %v387 = vld [vmem:[#allocation7 + $0x10] sm:$0xff]
        %v388 = vld [vmem:[#allocation7 + $0x18] sm:$0xff]
        %v389 = vld [vmem:[%s3] sm:$0x1]
        %v390 = vld [vmem:[#allocation8] sm:$0xff]
        %v391 = vld [vmem:[#allocation8 + $0x8] sm:$0xff]
        %v392 = vld [vmem:[#allocation8 + $0x10] sm:$0xff]
        %v393 = vld [vmem:[#allocation8 + $0x18] sm:$0xff]
        %v394 = vld [vmem:[%s5] sm:$0x1]
        %v396 = vperm.slane %v389, 0
        %vm398 = vcmask 261120
        %v400 = vsel %vm398, %v382, 0
        %v403 = vsel %vm398, %v383, 0
        %v406 = vsel %vm398, %v384, 0
        %408 = vmatpush.msra.mxu0 0.0
        %409 = vmatpush.msra.mxu0 0.0
        %410 = vmatpush.msra.mxu0 0.0
        %411 = vmatpush.msra.mxu0 0.0
        %412 = vmatpush.msra.mxu0 0.0
        %413 = vmatpush.msra.mxu0 0.0
        %414 = vmatpush.msra.mxu0 0.0
        %415 = vmatpush.msra.mxu0 0.0
        %416 = vmatpush.msra.mxu0 0.0
        %417 = vmatpush.msra.mxu0 0.0
        %418 = vmatpush.msra.mxu0 0.0
        %419 = vmatpush.msra.mxu0 0.0
        %420 = vmatpush.msra.mxu0 %v388
        %421 = vmatpush.msra.mxu0 %v387
        %422 = vmatpush.msra.mxu0 %v386
        %423 = vmatpush.msra.mxu0 %v385
        %424 = vmatmul.f32.gmra.mxu0 %v400
        %v425 = vpop.f32.mrf.mxu0
        %v426 = vadd.f32 %v396, %v425
        %427 = vmatmul.f32.gmra.mxu0 %v403
        %v428 = vpop.f32.mrf.mxu0
        %v429 = vadd.f32 %v396, %v428
        %430 = vmatmul.f32.gmra.mxu0 %v406
        %v431 = vpop.f32.mrf.mxu0
        %v432 = vadd.f32 %v396, %v431
        %433 = vdwg.mxu0
        %v434 = vlaneseq
        %v435 = vshrl.u32 %v434, 7
        %v436 = vadd.s32 %v435, 8
        %v437 = vadd.s32 %v435, 16
        %v438 = vlaneseq
        %v439 = vand.u32 %v438, 127
        %vm440 = vcmp.lt.s32.totalorder %v435, 8
        %vm441 = vcmp.lt.s32.totalorder %v436, 8
        %vm442 = vcmp.lt.s32.totalorder %v437, 8
        %vm443 = vcmp.lt.s32.totalorder %v439, 8
        %vm444 = vmxor %vm440, %vm443
        %vm445 = vmxor %vm441, %vm443
        %vm446 = vmxor %vm442, %vm443
        %450 = vrot.lane.b32.xlu0 %v426, 96
        %v451 = vpop.permute.xlu0 %450
        %452 = vrot.lane.b32.xlu0 %v429, 96
        %v453 = vpop.permute.xlu0 %452
        %454 = vrot.lane.b32.xlu0 %v432, 96
        %v455 = vpop.permute.xlu0 %454
        %vm456 = vcmask 64512
        %v457 = vsel %vm456, %v426, 0
        %v459 = vsel %vm456, %v429, 0
        %v461 = vsel %vm456, %v432, 0
        %v463 = vsel %vm456, %v451, 0
        %v465 = vsel %vm456, %v453, 0
        %v467 = vsel %vm456, %v455, 0
        %469 = vmatpush.xpose.msra.mxu0 0.0
        %470 = vmatpush.xpose.msra.mxu0 0.0
        %471 = vmatpush.xpose.msra.mxu0 0.0
        %472 = vmatpush.xpose.msra.mxu0 0.0
        %473 = vmatpush.xpose.msra.mxu0 0.0
        %474 = vmatpush.xpose.msra.mxu0 0.0
        %475 = vmatpush.xpose.msra.mxu0 0.0
        %476 = vmatpush.xpose.msra.mxu0 0.0
        %477 = vmatpush.xpose.msra.mxu0 0.0
        %478 = vmatpush.xpose.msra.mxu0 0.0
        %479 = vmatpush.xpose.msra.mxu0 0.0
        %480 = vmatpush.xpose.msra.mxu0 0.0
        %481 = vmatpush.xpose.msra.mxu0 0.0
        %482 = vmatpush.xpose.msra.mxu0 %v467
        %483 = vmatpush.xpose.msra.mxu0 %v465
        %484 = vmatpush.xpose.msra.mxu0 %v463
        %485 = vmatmul.f32.gmra.mxu0 %v457
        %v486 = vpop.f32.mrf.mxu0
        %v487 = vadd.f32 0.0, %v486
        %488 = vmatmul.f32.gmra.mxu0 %v459
        %v489 = vpop.f32.mrf.mxu0
        %v490 = vadd.f32 0.0, %v489
        %491 = vmatmul.f32.gmra.mxu0 %v461
        %v492 = vpop.f32.mrf.mxu0
        %v493 = vadd.f32 0.0, %v492
        %494 = vdwg.mxu0
        %v495 = vmul.f32 %v487, 0.35355338
        %v496 = vmul.f32 %v490, 0.35355338
        %v497 = vmul.f32 %v493, 0.35355338
        %v498 = vsel %vm444, %v495, -1e+30
        %v499 = vsel %vm445, %v496, -1e+30
        %v500 = vsel %vm446, %v497, -1e+30
        %vm501 = vcmask 195584
        %v502 = vsel %vm501, %v498, -inf
        %503 = vmax.xlane.f32.xlu0 %v502
        %v504 = vpop.xlane.xlu0 %503
        %v505 = vsel %vm501, %v499, -inf
        %506 = vmax.xlane.f32.xlu0 %v505
        %v507 = vpop.xlane.xlu0 %506
        %v508 = vsel %vm501, %v500, -inf
        %509 = vmax.xlane.f32.xlu0 %v508
        %v510 = vpop.xlane.xlu0 %509
        %v511 = vsub.f32 %v498, %v504
        %v512 = vsub.f32 %v499, %v507
        %v513 = vsub.f32 %v500, %v510
        %v514 = vmul.f32 %v511, 1.442695
        %v515 = vpow.pop %v514
        %v516 = vmul.f32 %v512, 1.442695
        %v517 = vpow.pop %v516
        %v518 = vmul.f32 %v513, 1.442695
        %v519 = vpow.pop %v518
        %v520 = vsel %vm501, %v515, 0.0
        %521 = vadd.xlane.f32.xlu0 %v520
        %v522 = vpop.xlane.xlu0 %521
        %v523 = vsel %vm501, %v517, 0.0
        %524 = vadd.xlane.f32.xlu0 %v523
        %v525 = vpop.xlane.xlu0 %524
        %v526 = vsel %vm501, %v519, 0.0
        %527 = vadd.xlane.f32.xlu0 %v526
        %v528 = vpop.xlane.xlu0 %527
        %v529 = vrcp.pop %v522
        %v530 = vmul.f32 %v522, %v529
        %v531 = vsub.f32 1.0, %v530
        %v532 = vmul.f32 %v529, %v531
        %v533 = vadd.f32 %v529, %v532
        %vm534 = vweird.f32 %v522
        %vm535 = vweird.f32 %v529
        %vm536 = vmor %vm534, %vm535
        %v537 = vsel %vm536, %v529, %v533
        %v538 = vand.u32 2147483647, %v522
        %vm539 = vcmp.eq.f32.partialorder %v538, 8.507059e+37
        %v540 = vand.u32 %v522, 2147483648
        %v541 = vor.u32 1.1754944e-38, %v540
        %v542 = vsel %vm539, %v541, %v537
        %v543 = vmul.f32 %v515, %v542
        %v544 = vrcp.pop %v525
        %v545 = vmul.f32 %v525, %v544
        %v546 = vsub.f32 1.0, %v545
        %v547 = vmul.f32 %v544, %v546
        %v548 = vadd.f32 %v544, %v547
        %vm549 = vweird.f32 %v525
        %vm550 = vweird.f32 %v544
        %vm551 = vmor %vm549, %vm550
        %v552 = vsel %vm551, %v544, %v548
        %v553 = vand.u32 2147483647, %v525
        %vm554 = vcmp.eq.f32.partialorder %v553, 8.507059e+37
        %v555 = vand.u32 %v525, 2147483648
        %v556 = vor.u32 1.1754944e-38, %v555
        %v557 = vsel %vm554, %v556, %v552
        %v558 = vmul.f32 %v517, %v557
        %v559 = vrcp.pop %v528
        %v560 = vmul.f32 %v528, %v559
        %v561 = vsub.f32 1.0, %v560
        %v562 = vmul.f32 %v559, %v561
        %v563 = vadd.f32 %v559, %v562
        %vm564 = vweird.f32 %v528
        %vm565 = vweird.f32 %v559
        %vm566 = vmor %vm564, %vm565
        %v567 = vsel %vm566, %v559, %v563
        %v568 = vand.u32 2147483647, %v528
        %vm569 = vcmp.eq.f32.partialorder %v568, 8.507059e+37
        %v570 = vand.u32 %v528, 2147483648
        %v571 = vor.u32 1.1754944e-38, %v570
        %v572 = vsel %vm569, %v571, %v567
        %v573 = vmul.f32 %v519, %v572
        %574 = vrot.lane.b32.xlu0 %v426, 64
        %v575 = vpop.permute.xlu0 %574
        %576 = vrot.lane.b32.xlu0 %v429, 64
        %v577 = vpop.permute.xlu0 %576
        %578 = vrot.lane.b32.xlu0 %v432, 64
        %v579 = vpop.permute.xlu0 %578
        %v584 = vsel %vm501, %v543, 0
        %v587 = vsel %vm501, %v558, 0
        %v590 = vsel %vm501, %v573, 0
        %592 = vmatpush.msra.mxu0 0.0
        %593 = vmatpush.msra.mxu0 0.0
        %594 = vmatpush.msra.mxu0 0.0
        %595 = vmatpush.msra.mxu0 0.0
        %596 = vmatpush.msra.mxu0 0.0
        %597 = vmatpush.msra.mxu0 0.0
        %598 = vmatpush.msra.mxu0 0.0
        %599 = vmatpush.msra.mxu0 0.0
        %600 = vmatpush.msra.mxu0 0.0
        %601 = vmatpush.msra.mxu0 0.0
        %602 = vmatpush.msra.mxu0 0.0
        %603 = vmatpush.msra.mxu0 0.0
        %604 = vmatpush.msra.mxu0 0.0
        %605 = vmatpush.msra.mxu0 %v579
        %606 = vmatpush.msra.mxu0 %v577
        %607 = vmatpush.msra.mxu0 %v575
        %608 = vmatmul.f32.gmra.mxu0 %v584
        %v609 = vpop.f32.mrf.mxu0
        %v610 = vadd.f32 0.0, %v609
        %611 = vmatmul.f32.gmra.mxu0 %v587
        %v612 = vpop.f32.mrf.mxu0
        %v613 = vadd.f32 0.0, %v612
        %614 = vmatmul.f32.gmra.mxu0 %v590
        %v615 = vpop.f32.mrf.mxu0
        %v616 = vadd.f32 0.0, %v615
        %617 = vdwg.mxu0
        %618 = vrot.lane.b32.xlu0 %v426, 120
        %v619 = vpop.permute.xlu0 %618
        %620 = vrot.lane.b32.xlu0 %v429, 120
        %v621 = vpop.permute.xlu0 %620
        %622 = vrot.lane.b32.xlu0 %v432, 120
        %v623 = vpop.permute.xlu0 %622
        %624 = vrot.lane.b32.xlu0 %v426, 88
        %v625 = vpop.permute.xlu0 %624
        %626 = vrot.lane.b32.xlu0 %v429, 88
        %v627 = vpop.permute.xlu0 %626
        %628 = vrot.lane.b32.xlu0 %v432, 88
        %v629 = vpop.permute.xlu0 %628
        %v630 = vsel %vm456, %v619, 0
        %v632 = vsel %vm456, %v621, 0
        %v634 = vsel %vm456, %v623, 0
        %v636 = vsel %vm456, %v625, 0
        %v638 = vsel %vm456, %v627, 0
        %v640 = vsel %vm456, %v629, 0
        %642 = vmatpush.xpose.msra.mxu0 0.0
        %643 = vmatpush.xpose.msra.mxu0 0.0
        %644 = vmatpush.xpose.msra.mxu0 0.0
        %645 = vmatpush.xpose.msra.mxu0 0.0
        %646 = vmatpush.xpose.msra.mxu0 0.0
        %647 = vmatpush.xpose.msra.mxu0 0.0
        %648 = vmatpush.xpose.msra.mxu0 0.0
        %649 = vmatpush.xpose.msra.mxu0 0.0
        %650 = vmatpush.xpose.msra.mxu0 0.0
        %651 = vmatpush.xpose.msra.mxu0 0.0
        %652 = vmatpush.xpose.msra.mxu0 0.0
        %653 = vmatpush.xpose.msra.mxu0 0.0
        %654 = vmatpush.xpose.msra.mxu0 0.0
        %655 = vmatpush.xpose.msra.mxu0 %v640
        %656 = vmatpush.xpose.msra.mxu0 %v638
        %657 = vmatpush.xpose.msra.mxu0 %v636
        %658 = vmatmul.f32.gmra.mxu0 %v630
        %v659 = vpop.f32.mrf.mxu0
        %v660 = vadd.f32 0.0, %v659
        %661 = vmatmul.f32.gmra.mxu0 %v632
        %v662 = vpop.f32.mrf.mxu0
        %v663 = vadd.f32 0.0, %v662
        %664 = vmatmul.f32.gmra.mxu0 %v634
        %v665 = vpop.f32.mrf.mxu0
        %v666 = vadd.f32 0.0, %v665
        %667 = vdwg.mxu0
        %v668 = vmul.f32 %v660, 0.35355338
        %v669 = vmul.f32 %v663, 0.35355338
        %v670 = vmul.f32 %v666, 0.35355338
        %v671 = vsel %vm444, %v668, -1e+30
        %v672 = vsel %vm445, %v669, -1e+30
        %v673 = vsel %vm446, %v670, -1e+30
        %v674 = vsel %vm501, %v671, -inf
        %675 = vmax.xlane.f32.xlu0 %v674
        %v676 = vpop.xlane.xlu0 %675
        %v677 = vsel %vm501, %v672, -inf
        %678 = vmax.xlane.f32.xlu0 %v677
        %v679 = vpop.xlane.xlu0 %678
        %v680 = vsel %vm501, %v673, -inf
        %681 = vmax.xlane.f32.xlu0 %v680
        %v682 = vpop.xlane.xlu0 %681
        %v683 = vsub.f32 %v671, %v676
        %v684 = vsub.f32 %v672, %v679
        %v685 = vsub.f32 %v673, %v682
        %v686 = vmul.f32 %v683, 1.442695
        %v687 = vpow.pop %v686
        %v688 = vmul.f32 %v684, 1.442695
        %v689 = vpow.pop %v688
        %v690 = vmul.f32 %v685, 1.442695
        %v691 = vpow.pop %v690
        %v692 = vsel %vm501, %v687, 0.0
        %693 = vadd.xlane.f32.xlu0 %v692
        %v694 = vpop.xlane.xlu0 %693
        %v695 = vsel %vm501, %v689, 0.0
        %696 = vadd.xlane.f32.xlu0 %v695
        %v697 = vpop.xlane.xlu0 %696
        %v698 = vsel %vm501, %v691, 0.0
        %699 = vadd.xlane.f32.xlu0 %v698
        %v700 = vpop.xlane.xlu0 %699
        %v701 = vrcp.pop %v694
        %v702 = vmul.f32 %v694, %v701
        %v703 = vsub.f32 1.0, %v702
        %v704 = vmul.f32 %v701, %v703
        %v705 = vadd.f32 %v701, %v704
        %vm706 = vweird.f32 %v694
        %vm707 = vweird.f32 %v701
        %vm708 = vmor %vm706, %vm707
        %v709 = vsel %vm708, %v701, %v705
        %v710 = vand.u32 2147483647, %v694
        %vm711 = vcmp.eq.f32.partialorder %v710, 8.507059e+37
        %v712 = vand.u32 %v694, 2147483648
        %v713 = vor.u32 1.1754944e-38, %v712
        %v714 = vsel %vm711, %v713, %v709
        %v715 = vmul.f32 %v687, %v714
        %v716 = vrcp.pop %v697
        %v717 = vmul.f32 %v697, %v716
        %v718 = vsub.f32 1.0, %v717
        %v719 = vmul.f32 %v716, %v718
        %v720 = vadd.f32 %v716, %v719
        %vm721 = vweird.f32 %v697
        %vm722 = vweird.f32 %v716
        %vm723 = vmor %vm721, %vm722
        %v724 = vsel %vm723, %v716, %v720
        %v725 = vand.u32 2147483647, %v697
        %vm726 = vcmp.eq.f32.partialorder %v725, 8.507059e+37
        %v727 = vand.u32 %v697, 2147483648
        %v728 = vor.u32 1.1754944e-38, %v727
        %v729 = vsel %vm726, %v728, %v724
        %v730 = vmul.f32 %v689, %v729
        %v731 = vrcp.pop %v700
        %v732 = vmul.f32 %v700, %v731
        %v733 = vsub.f32 1.0, %v732
        %v734 = vmul.f32 %v731, %v733
        %v735 = vadd.f32 %v731, %v734
        %vm736 = vweird.f32 %v700
        %vm737 = vweird.f32 %v731
        %vm738 = vmor %vm736, %vm737
        %v739 = vsel %vm738, %v731, %v735
        %v740 = vand.u32 2147483647, %v700
        %vm741 = vcmp.eq.f32.partialorder %v740, 8.507059e+37
        %v742 = vand.u32 %v700, 2147483648
        %v743 = vor.u32 1.1754944e-38, %v742
        %v744 = vsel %vm741, %v743, %v739
        %v745 = vmul.f32 %v691, %v744
        %746 = vrot.lane.b32.xlu0 %v426, 56
        %v747 = vpop.permute.xlu0 %746
        %748 = vrot.lane.b32.xlu0 %v429, 56
        %v749 = vpop.permute.xlu0 %748
        %750 = vrot.lane.b32.xlu0 %v432, 56
        %v751 = vpop.permute.xlu0 %750
        %v756 = vsel %vm501, %v715, 0
        %v759 = vsel %vm501, %v730, 0
        %v762 = vsel %vm501, %v745, 0
        %764 = vmatpush.msra.mxu0 0.0
        %765 = vmatpush.msra.mxu0 0.0
        %766 = vmatpush.msra.mxu0 0.0
        %767 = vmatpush.msra.mxu0 0.0
        %768 = vmatpush.msra.mxu0 0.0
        %769 = vmatpush.msra.mxu0 0.0
        %770 = vmatpush.msra.mxu0 0.0
        %771 = vmatpush.msra.mxu0 0.0
        %772 = vmatpush.msra.mxu0 0.0
        %773 = vmatpush.msra.mxu0 0.0
        %774 = vmatpush.msra.mxu0 0.0
        %775 = vmatpush.msra.mxu0 0.0
        %776 = vmatpush.msra.mxu0 0.0
        %777 = vmatpush.msra.mxu0 %v751
        %778 = vmatpush.msra.mxu0 %v749
        %779 = vmatpush.msra.mxu0 %v747
        %780 = vmatmul.f32.gmra.mxu0 %v756
        %v781 = vpop.f32.mrf.mxu0
        %v782 = vadd.f32 0.0, %v781
        %783 = vmatmul.f32.gmra.mxu0 %v759
        %v784 = vpop.f32.mrf.mxu0
        %v785 = vadd.f32 0.0, %v784
        %786 = vmatmul.f32.gmra.mxu0 %v762
        %v787 = vpop.f32.mrf.mxu0
        %v788 = vadd.f32 0.0, %v787
        %789 = vdwg.mxu0
        %790 = vrot.lane.b32.xlu0 %v426, 112
        %v791 = vpop.permute.xlu0 %790
        %792 = vrot.lane.b32.xlu0 %v429, 112
        %v793 = vpop.permute.xlu0 %792
        %794 = vrot.lane.b32.xlu0 %v432, 112
        %v795 = vpop.permute.xlu0 %794
        %796 = vrot.lane.b32.xlu0 %v426, 80
        %v797 = vpop.permute.xlu0 %796
        %798 = vrot.lane.b32.xlu0 %v429, 80
        %v799 = vpop.permute.xlu0 %798
        %800 = vrot.lane.b32.xlu0 %v432, 80
        %v801 = vpop.permute.xlu0 %800
        %v802 = vsel %vm456, %v791, 0
        %v804 = vsel %vm456, %v793, 0
        %v806 = vsel %vm456, %v795, 0
        %v808 = vsel %vm456, %v797, 0
        %v810 = vsel %vm456, %v799, 0
        %v812 = vsel %vm456, %v801, 0
        %814 = vmatpush.xpose.msra.mxu0 0.0
        %815 = vmatpush.xpose.msra.mxu0 0.0
        %816 = vmatpush.xpose.msra.mxu0 0.0
        %817 = vmatpush.xpose.msra.mxu0 0.0
        %818 = vmatpush.xpose.msra.mxu0 0.0
        %819 = vmatpush.xpose.msra.mxu0 0.0
        %820 = vmatpush.xpose.msra.mxu0 0.0
        %821 = vmatpush.xpose.msra.mxu0 0.0
        %822 = vmatpush.xpose.msra.mxu0 0.0
        %823 = vmatpush.xpose.msra.mxu0 0.0
        %824 = vmatpush.xpose.msra.mxu0 0.0
        %825 = vmatpush.xpose.msra.mxu0 0.0
        %826 = vmatpush.xpose.msra.mxu0 0.0
        %827 = vmatpush.xpose.msra.mxu0 %v812
        %828 = vmatpush.xpose.msra.mxu0 %v810
        %829 = vmatpush.xpose.msra.mxu0 %v808
        %830 = vmatmul.f32.gmra.mxu0 %v802
        %v831 = vpop.f32.mrf.mxu0
        %v832 = vadd.f32 0.0, %v831
        %833 = vmatmul.f32.gmra.mxu0 %v804
        %v834 = vpop.f32.mrf.mxu0
        %v835 = vadd.f32 0.0, %v834
        %836 = vmatmul.f32.gmra.mxu0 %v806
        %v837 = vpop.f32.mrf.mxu0
        %v838 = vadd.f32 0.0, %v837
        %839 = vdwg.mxu0
        %v840 = vmul.f32 %v832, 0.35355338
        %v841 = vmul.f32 %v835, 0.35355338
        %v842 = vmul.f32 %v838, 0.35355338
        %v843 = vsel %vm444, %v840, -1e+30
        %v844 = vsel %vm445, %v841, -1e+30
        %v845 = vsel %vm446, %v842, -1e+30
        %v846 = vsel %vm501, %v843, -inf
        %847 = vmax.xlane.f32.xlu0 %v846
        %v848 = vpop.xlane.xlu0 %847
        %v849 = vsel %vm501, %v844, -inf
        %850 = vmax.xlane.f32.xlu0 %v849
        %v851 = vpop.xlane.xlu0 %850
        %v852 = vsel %vm501, %v845, -inf
        %853 = vmax.xlane.f32.xlu0 %v852
        %v854 = vpop.xlane.xlu0 %853
        %v855 = vsub.f32 %v843, %v848
        %v856 = vsub.f32 %v844, %v851
        %v857 = vsub.f32 %v845, %v854
        %v858 = vmul.f32 %v855, 1.442695
        %v859 = vpow.pop %v858
        %v860 = vmul.f32 %v856, 1.442695
        %v861 = vpow.pop %v860
        %v862 = vmul.f32 %v857, 1.442695
        %v863 = vpow.pop %v862
        %v864 = vsel %vm501, %v859, 0.0
        %865 = vadd.xlane.f32.xlu0 %v864
        %v866 = vpop.xlane.xlu0 %865
        %v867 = vsel %vm501, %v861, 0.0
        %868 = vadd.xlane.f32.xlu0 %v867
        %v869 = vpop.xlane.xlu0 %868
        %v870 = vsel %vm501, %v863, 0.0
        %871 = vadd.xlane.f32.xlu0 %v870
        %v872 = vpop.xlane.xlu0 %871
        %v873 = vrcp.pop %v866
        %v874 = vmul.f32 %v866, %v873
        %v875 = vsub.f32 1.0, %v874
        %v876 = vmul.f32 %v873, %v875
        %v877 = vadd.f32 %v873, %v876
        %vm878 = vweird.f32 %v866
        %vm879 = vweird.f32 %v873
        %vm880 = vmor %vm878, %vm879
        %v881 = vsel %vm880, %v873, %v877
        %v882 = vand.u32 2147483647, %v866
        %vm883 = vcmp.eq.f32.partialorder %v882, 8.507059e+37
        %v884 = vand.u32 %v866, 2147483648
        %v885 = vor.u32 1.1754944e-38, %v884
        %v886 = vsel %vm883, %v885, %v881
        %v887 = vmul.f32 %v859, %v886
        %v888 = vrcp.pop %v869
        %v889 = vmul.f32 %v869, %v888
        %v890 = vsub.f32 1.0, %v889
        %v891 = vmul.f32 %v888, %v890
        %v892 = vadd.f32 %v888, %v891
        %vm893 = vweird.f32 %v869
        %vm894 = vweird.f32 %v888
        %vm895 = vmor %vm893, %vm894
        %v896 = vsel %vm895, %v888, %v892
        %v897 = vand.u32 2147483647, %v869
        %vm898 = vcmp.eq.f32.partialorder %v897, 8.507059e+37
        %v899 = vand.u32 %v869, 2147483648
        %v900 = vor.u32 1.1754944e-38, %v899
        %v901 = vsel %vm898, %v900, %v896
        %v902 = vmul.f32 %v861, %v901
        %v903 = vrcp.pop %v872
        %v904 = vmul.f32 %v872, %v903
        %v905 = vsub.f32 1.0, %v904
        %v906 = vmul.f32 %v903, %v905
        %v907 = vadd.f32 %v903, %v906
        %vm908 = vweird.f32 %v872
        %vm909 = vweird.f32 %v903
        %vm910 = vmor %vm908, %vm909
        %v911 = vsel %vm910, %v903, %v907
        %v912 = vand.u32 2147483647, %v872
        %vm913 = vcmp.eq.f32.partialorder %v912, 8.507059e+37
        %v914 = vand.u32 %v872, 2147483648
        %v915 = vor.u32 1.1754944e-38, %v914
        %v916 = vsel %vm913, %v915, %v911
        %v917 = vmul.f32 %v863, %v916
        %918 = vrot.lane.b32.xlu0 %v426, 48
        %v919 = vpop.permute.xlu0 %918
        %920 = vrot.lane.b32.xlu0 %v429, 48
        %v921 = vpop.permute.xlu0 %920
        %922 = vrot.lane.b32.xlu0 %v432, 48
        %v923 = vpop.permute.xlu0 %922
        %v928 = vsel %vm501, %v887, 0
        %v931 = vsel %vm501, %v902, 0
        %v934 = vsel %vm501, %v917, 0
        %936 = vmatpush.msra.mxu0 0.0
        %937 = vmatpush.msra.mxu0 0.0
        %938 = vmatpush.msra.mxu0 0.0
        %939 = vmatpush.msra.mxu0 0.0
        %940 = vmatpush.msra.mxu0 0.0
        %941 = vmatpush.msra.mxu0 0.0
        %942 = vmatpush.msra.mxu0 0.0
        %943 = vmatpush.msra.mxu0 0.0
        %944 = vmatpush.msra.mxu0 0.0
        %945 = vmatpush.msra.mxu0 0.0
        %946 = vmatpush.msra.mxu0 0.0
        %947 = vmatpush.msra.mxu0 0.0
        %948 = vmatpush.msra.mxu0 0.0
        %949 = vmatpush.msra.mxu0 %v923
        %950 = vmatpush.msra.mxu0 %v921
        %951 = vmatpush.msra.mxu0 %v919
        %952 = vmatmul.f32.gmra.mxu0 %v928
        %v953 = vpop.f32.mrf.mxu0
        %v954 = vadd.f32 0.0, %v953
        %955 = vmatmul.f32.gmra.mxu0 %v931
        %v956 = vpop.f32.mrf.mxu0
        %v957 = vadd.f32 0.0, %v956
        %958 = vmatmul.f32.gmra.mxu0 %v934
        %v959 = vpop.f32.mrf.mxu0
        %v960 = vadd.f32 0.0, %v959
        %961 = vdwg.mxu0
        %962 = vrot.lane.b32.xlu0 %v426, 104
        %v963 = vpop.permute.xlu0 %962
        %964 = vrot.lane.b32.xlu0 %v429, 104
        %v965 = vpop.permute.xlu0 %964
        %966 = vrot.lane.b32.xlu0 %v432, 104
        %v967 = vpop.permute.xlu0 %966
        %968 = vrot.lane.b32.xlu0 %v426, 72
        %v969 = vpop.permute.xlu0 %968
        %970 = vrot.lane.b32.xlu0 %v429, 72
        %v971 = vpop.permute.xlu0 %970
        %972 = vrot.lane.b32.xlu0 %v432, 72
        %v973 = vpop.permute.xlu0 %972
        %v974 = vsel %vm456, %v963, 0
        %v976 = vsel %vm456, %v965, 0
        %v978 = vsel %vm456, %v967, 0
        %v980 = vsel %vm456, %v969, 0
        %v982 = vsel %vm456, %v971, 0
        %v984 = vsel %vm456, %v973, 0
        %986 = vmatpush.xpose.msra.mxu0 0.0
        %987 = vmatpush.xpose.msra.mxu0 0.0
        %988 = vmatpush.xpose.msra.mxu0 0.0
        %989 = vmatpush.xpose.msra.mxu0 0.0
        %990 = vmatpush.xpose.msra.mxu0 0.0
        %991 = vmatpush.xpose.msra.mxu0 0.0
        %992 = vmatpush.xpose.msra.mxu0 0.0
        %993 = vmatpush.xpose.msra.mxu0 0.0
        %994 = vmatpush.xpose.msra.mxu0 0.0
        %995 = vmatpush.xpose.msra.mxu0 0.0
        %996 = vmatpush.xpose.msra.mxu0 0.0
        %997 = vmatpush.xpose.msra.mxu0 0.0
        %998 = vmatpush.xpose.msra.mxu0 0.0
        %999 = vmatpush.xpose.msra.mxu0 %v984
        %1000 = vmatpush.xpose.msra.mxu0 %v982
        %1001 = vmatpush.xpose.msra.mxu0 %v980
        %1002 = vmatmul.f32.gmra.mxu0 %v974
        %v1003 = vpop.f32.mrf.mxu0
        %v1004 = vadd.f32 0.0, %v1003
        %1005 = vmatmul.f32.gmra.mxu0 %v976
        %v1006 = vpop.f32.mrf.mxu0
        %v1007 = vadd.f32 0.0, %v1006
        %1008 = vmatmul.f32.gmra.mxu0 %v978
        %v1009 = vpop.f32.mrf.mxu0
        %v1010 = vadd.f32 0.0, %v1009
        %1011 = vdwg.mxu0
        %v1012 = vmul.f32 %v1004, 0.35355338
        %v1013 = vmul.f32 %v1007, 0.35355338
        %v1014 = vmul.f32 %v1010, 0.35355338
        %v1015 = vsel %vm444, %v1012, -1e+30
        %v1016 = vsel %vm445, %v1013, -1e+30
        %v1017 = vsel %vm446, %v1014, -1e+30
        %v1018 = vsel %vm501, %v1015, -inf
        %1019 = vmax.xlane.f32.xlu0 %v1018
        %v1020 = vpop.xlane.xlu0 %1019
        %v1021 = vsel %vm501, %v1016, -inf
        %1022 = vmax.xlane.f32.xlu0 %v1021
        %v1023 = vpop.xlane.xlu0 %1022
        %v1024 = vsel %vm501, %v1017, -inf
        %1025 = vmax.xlane.f32.xlu0 %v1024
        %v1026 = vpop.xlane.xlu0 %1025
        %v1027 = vsub.f32 %v1015, %v1020
        %v1028 = vsub.f32 %v1016, %v1023
        %v1029 = vsub.f32 %v1017, %v1026
        %v1030 = vmul.f32 %v1027, 1.442695
        %v1031 = vpow.pop %v1030
        %v1032 = vmul.f32 %v1028, 1.442695
        %v1033 = vpow.pop %v1032
        %v1034 = vmul.f32 %v1029, 1.442695
        %v1035 = vpow.pop %v1034
        %v1036 = vsel %vm501, %v1031, 0.0
        %1037 = vadd.xlane.f32.xlu0 %v1036
        %v1038 = vpop.xlane.xlu0 %1037
        %v1039 = vsel %vm501, %v1033, 0.0
        %1040 = vadd.xlane.f32.xlu0 %v1039
        %v1041 = vpop.xlane.xlu0 %1040
        %v1042 = vsel %vm501, %v1035, 0.0
        %1043 = vadd.xlane.f32.xlu0 %v1042
        %v1044 = vpop.xlane.xlu0 %1043
        %v1045 = vrcp.pop %v1038
        %v1046 = vmul.f32 %v1038, %v1045
        %v1047 = vsub.f32 1.0, %v1046
        %v1048 = vmul.f32 %v1045, %v1047
        %v1049 = vadd.f32 %v1045, %v1048
        %vm1050 = vweird.f32 %v1038
        %vm1051 = vweird.f32 %v1045
        %vm1052 = vmor %vm1050, %vm1051
        %v1053 = vsel %vm1052, %v1045, %v1049
        %v1054 = vand.u32 2147483647, %v1038
        %vm1055 = vcmp.eq.f32.partialorder %v1054, 8.507059e+37
        %v1056 = vand.u32 %v1038, 2147483648
        %v1057 = vor.u32 1.1754944e-38, %v1056
        %v1058 = vsel %vm1055, %v1057, %v1053
        %v1059 = vmul.f32 %v1031, %v1058
        %v1060 = vrcp.pop %v1041
        %v1061 = vmul.f32 %v1041, %v1060
        %v1062 = vsub.f32 1.0, %v1061
        %v1063 = vmul.f32 %v1060, %v1062
        %v1064 = vadd.f32 %v1060, %v1063
        %vm1065 = vweird.f32 %v1041
        %vm1066 = vweird.f32 %v1060
        %vm1067 = vmor %vm1065, %vm1066
        %v1068 = vsel %vm1067, %v1060, %v1064
        %v1069 = vand.u32 2147483647, %v1041
        %vm1070 = vcmp.eq.f32.partialorder %v1069, 8.507059e+37
        %v1071 = vand.u32 %v1041, 2147483648
        %v1072 = vor.u32 1.1754944e-38, %v1071
        %v1073 = vsel %vm1070, %v1072, %v1068
        %v1074 = vmul.f32 %v1033, %v1073
        %v1075 = vrcp.pop %v1044
        %v1076 = vmul.f32 %v1044, %v1075
        %v1077 = vsub.f32 1.0, %v1076
        %v1078 = vmul.f32 %v1075, %v1077
        %v1079 = vadd.f32 %v1075, %v1078
        %vm1080 = vweird.f32 %v1044
        %vm1081 = vweird.f32 %v1075
        %vm1082 = vmor %vm1080, %vm1081
        %v1083 = vsel %vm1082, %v1075, %v1079
        %v1084 = vand.u32 2147483647, %v1044
        %vm1085 = vcmp.eq.f32.partialorder %v1084, 8.507059e+37
        %v1086 = vand.u32 %v1044, 2147483648
        %v1087 = vor.u32 1.1754944e-38, %v1086
        %v1088 = vsel %vm1085, %v1087, %v1083
        %v1089 = vmul.f32 %v1035, %v1088
        %1090 = vrot.lane.b32.xlu0 %v426, 40
        %v1091 = vpop.permute.xlu0 %1090
        %1092 = vrot.lane.b32.xlu0 %v429, 40
        %v1093 = vpop.permute.xlu0 %1092
        %1094 = vrot.lane.b32.xlu0 %v432, 40
        %v1095 = vpop.permute.xlu0 %1094
        %v1100 = vsel %vm501, %v1059, 0
        %v1103 = vsel %vm501, %v1074, 0
        %v1106 = vsel %vm501, %v1089, 0
        %1108 = vmatpush.msra.mxu0 0.0
        %1109 = vmatpush.msra.mxu0 0.0
        %1110 = vmatpush.msra.mxu0 0.0
        %1111 = vmatpush.msra.mxu0 0.0
        %1112 = vmatpush.msra.mxu0 0.0
        %1113 = vmatpush.msra.mxu0 0.0
        %1114 = vmatpush.msra.mxu0 0.0
        %1115 = vmatpush.msra.mxu0 0.0
        %1116 = vmatpush.msra.mxu0 0.0
        %1117 = vmatpush.msra.mxu0 0.0
        %1118 = vmatpush.msra.mxu0 0.0
        %1119 = vmatpush.msra.mxu0 0.0
        %1120 = vmatpush.msra.mxu0 0.0
        %1121 = vmatpush.msra.mxu0 %v1095
        %1122 = vmatpush.msra.mxu0 %v1093
        %1123 = vmatpush.msra.mxu0 %v1091
        %1124 = vmatmul.f32.gmra.mxu0 %v1100
        %v1125 = vpop.f32.mrf.mxu0
        %v1126 = vadd.f32 0.0, %v1125
        %1127 = vmatmul.f32.gmra.mxu0 %v1103
        %v1128 = vpop.f32.mrf.mxu0
        %v1129 = vadd.f32 0.0, %v1128
        %1130 = vmatmul.f32.gmra.mxu0 %v1106
        %v1131 = vpop.f32.mrf.mxu0
        %v1132 = vadd.f32 0.0, %v1131
        %1133 = vdwg.mxu0
        %1137 = vrot.lane.b32.xlu0 %v782, 8
        %v1138 = vpop.permute.xlu0 %1137
        %1139 = vrot.lane.b32.xlu0 %v785, 8
        %v1140 = vpop.permute.xlu0 %1139
        %1141 = vrot.lane.b32.xlu0 %v788, 8
        %v1142 = vpop.permute.xlu0 %1141
        %1149 = vrot.lane.b32.xlu0 %v954, 16
        %v1150 = vpop.permute.xlu0 %1149
        %1151 = vrot.lane.b32.xlu0 %v957, 16
        %v1152 = vpop.permute.xlu0 %1151
        %1153 = vrot.lane.b32.xlu0 %v960, 16
        %v1154 = vpop.permute.xlu0 %1153
        %1161 = vrot.lane.b32.xlu0 %v1126, 24
        %v1162 = vpop.permute.xlu0 %1161
        %1163 = vrot.lane.b32.xlu0 %v1129, 24
        %v1164 = vpop.permute.xlu0 %1163
        %1165 = vrot.lane.b32.xlu0 %v1132, 24
        %v1166 = vpop.permute.xlu0 %1165
        %v1170 = vsel %vm456, %v610, %v1138
        %v1171 = vsel %vm456, %v613, %v1140
        %v1172 = vsel %vm456, %v616, %v1142
        %vm1173 = vcmask 130048
        %v1174 = vsel %vm1173, %v1170, %v1150
        %v1175 = vsel %vm1173, %v1171, %v1152
        %v1176 = vsel %vm1173, %v1172, %v1154
        %v1177 = vsel %vm501, %v1174, %v1162
        %v1178 = vsel %vm501, %v1175, %v1164
        %v1179 = vsel %vm501, %v1176, %v1166
        %v1181 = vperm.slane %v394, 0
        %v1184 = vsel %vm398, %v1177, 0
        %v1187 = vsel %vm398, %v1178, 0
        %v1190 = vsel %vm398, %v1179, 0
        %1192 = vmatpush.msra.mxu0 0.0
        %1193 = vmatpush.msra.mxu0 0.0
        %1194 = vmatpush.msra.mxu0 0.0
        %1195 = vmatpush.msra.mxu0 0.0
        %1196 = vmatpush.msra.mxu0 0.0
        %1197 = vmatpush.msra.mxu0 0.0
        %1198 = vmatpush.msra.mxu0 0.0
        %1199 = vmatpush.msra.mxu0 0.0
        %1200 = vmatpush.msra.mxu0 0.0
        %1201 = vmatpush.msra.mxu0 0.0
        %1202 = vmatpush.msra.mxu0 0.0
        %1203 = vmatpush.msra.mxu0 0.0
        %1204 = vmatpush.msra.mxu0 %v393
        %1205 = vmatpush.msra.mxu0 %v392
        %1206 = vmatpush.msra.mxu0 %v391
        %1207 = vmatpush.msra.mxu0 %v390
        %1208 = vmatmul.f32.gmra.mxu0 %v1184
        %v1209 = vpop.f32.mrf.mxu0
        %v1210 = vadd.f32 %v1181, %v1209
        %1211 = vmatmul.f32.gmra.mxu0 %v1187
        %v1212 = vpop.f32.mrf.mxu0
        %v1213 = vadd.f32 %v1181, %v1212
        %1214 = vmatmul.f32.gmra.mxu0 %v1190
        %v1215 = vpop.f32.mrf.mxu0
        %v1216 = vadd.f32 %v1181, %v1215
        %1217 = vdwg.mxu0
        %1218 = vst.msk [vmem:[%s374] sm:$0xff] %vm398, %v1210
        %1219 = vst.msk [vmem:[%s381] sm:$0xff] %vm398, %v1213
        %1220 = vst.msk [vmem:[%s381 + $0x8] sm:$0xff] %vm398, %v1216
        %s1221 = sand.u32 %s176, 1
        %s1222 = scalar_lea.sflag [#allocation4], %s1221
        %s1223 = sand.u32 %s176, 1
        %s1224 = smul.addr %s1223, 8
        %s1225 = scalar_lea.vmem [#allocation10], %s1224
        %s1226 = sand.u32 %s202, 1
        %s1227 = scalar_lea.sflag [#allocation12], %s1226
        %s1228 = sand.u32 %s202, 1
        %s1229 = smul.addr %s1228, 16
        %s1230 = scalar_lea.vmem [#allocation11], %s1229
        // Predicated region
        $region61: #{tpu_custom_call.1} parent=43 // pred_check
          %p1231 = pneg %p186
        $region62: #{tpu_custom_call.1} parent=43 // pred_check_branch
          %1233 = sbr.rel (%p1231) target = $region64
        $region63: #{tpu_custom_call.1} parent=43 // pred_region
          %1235 = vsyncadd %s1222, 0
          %s1236 = smul.addr %s32, 8
          %s1237 = scalar_lea.hbm %s6, %s1236
          %s1239 = sshll.u32 %s1225, 4
          %s1240 = int_to_ptr.vmem [resolvable:$true] %s1239
          %s1241 = sshll.u32 %s1237, 4
          %s1242 = int_to_ptr.hbm [resolvable:$true] %s1241
          %1244 = dma.vmem_to_hbm [thread:$0]  %s1240, 128, %s1242, %s1222
        $region64: #{tpu_custom_call.1} parent=43 // pred_fallthru
          _
        // Predicated region
        $region65: #{tpu_custom_call.1} parent=43 // pred_check
          %p1245 = pneg %p212
        $region66: #{tpu_custom_call.1} parent=43 // pred_check_branch
          %1247 = sbr.rel (%p1245) target = $region68
        $region67: #{tpu_custom_call.1} parent=43 // pred_region
          %1249 = vsyncadd %s1227, 0
          %s1250 = smul.addr %s32, 2
          %s1251 = smul.addr %s1250, 8
          %s1252 = scalar_lea.hbm %s7, %s1251
          %s1253 = sshll.u32 %s1230, 4
          %s1254 = int_to_ptr.vmem [resolvable:$true] %s1253
          %s1255 = sshll.u32 %s1252, 4
          %s1256 = int_to_ptr.hbm [resolvable:$true] %s1255
          %1261 = dma.vmem_to_hbm [thread:$0]  %s1254, 256, %s1256, %s1227, 128, 128, 8
        $region68: #{tpu_custom_call.1} parent=43 // pred_fallthru
          _
      $region44: #{tpu_custom_call.1} parent=5 // pred_fallthru
        _
      %p1262 = scmp.le.s32.totalorder 2, %s27
      // Predicated region
      $region69: #{tpu_custom_call.1} parent=5 // pred_check
        %p1263 = pneg %p1262
      $region70: #{tpu_custom_call.1} parent=5 // pred_check_branch
        %1265 = sbr.rel (%p1263) target = $region72
      $region71: #{tpu_custom_call.1} parent=5 // pred_region
        %s1266 = ssub.s32 %s27, 2
        // Predicated region
        $region73: #{tpu_custom_call.1} parent=71 // pred_check
          %p1267 = pneg %p192
        $region74: #{tpu_custom_call.1} parent=71 // pred_check_branch
          %1269 = sbr.rel (%p1267) target = $region76
        $region75: #{tpu_custom_call.1} parent=71 // pred_region
          %s1270 = sand.u32 %s177, 1
          %s1271 = scalar_lea.sflag [#allocation4], %s1270
          %s1272 = sand.u32 %s177, 1
          %s1273 = smul.addr %s1272, 8
          %s1274 = scalar_lea.vmem [#allocation10], %s1273
          %1276 = dma.done %s1271, 128
        $region76: #{tpu_custom_call.1} parent=71 // pred_fallthru
          _
        // Predicated region
        $region77: #{tpu_custom_call.1} parent=71 // pred_check
          %p1277 = pneg %p218
        $region78: #{tpu_custom_call.1} parent=71 // pred_check_branch
          %1279 = sbr.rel (%p1277) target = $region80
        $region79: #{tpu_custom_call.1} parent=71 // pred_region
          %s1280 = sand.u32 %s203, 1
          %s1281 = scalar_lea.sflag [#allocation12], %s1280
          %s1282 = sand.u32 %s203, 1
          %s1283 = smul.addr %s1282, 16
          %s1284 = scalar_lea.vmem [#allocation11], %s1283
          %1286 = dma.done %s1281, 256
        $region80: #{tpu_custom_call.1} parent=71 // pred_fallthru
          _
      $region72: #{tpu_custom_call.1} parent=5 // pred_fallthru
        _
    $region6: #{tpu_custom_call.1} parent=1 // loop_footer
      %s31 = sadd.s32 1, %s27
    $region7: #{tpu_custom_call.1} parent=1 // loop_footer_branch
      %26 = sbr.rel target = $region3
    $region8: #{tpu_custom_call.1} parent=1 // loop_exit
      _
    %1287 = vsyncpa [#allocation3], 1
    %s1288 = scalar_lea.sflag [#allocation3], 1
    %1289 = vsyncpa %s1288, 1
    %1290 = vsyncpa [#allocation6], 1
    %s1291 = scalar_lea.sflag [#allocation6], 1
    %1292 = vsyncpa %s1291, 1
    %1293 = vsyncpa [#allocation9], 1
    %1294 = vsyncpa [#allocation4], 1
    %s1295 = scalar_lea.sflag [#allocation4], 1
    %1296 = vsyncpa %s1295, 1
    %1297 = vsyncpa [#allocation12], 1
    %s1298 = scalar_lea.sflag [#allocation12], 1
    %1299 = vsyncpa %s1298, 1

</llo_original>
